<compile_context>
chip_gen: v5e
topology: v5e:2x2
jax: 0.10.0
libtpu: 0.0.40
codegen_flags: <defaults>
</compile_context>

<pallas_src>
import functools
import math

import jax
import jax.numpy as jnp
from jax.experimental import pallas as pl

# ----------------------------- config ---------------------------------------
VOCAB = 128
HIDDEN = 32
NUM_HEADS = 2
HEAD_DIM = HIDDEN // NUM_HEADS
INTERMEDIATE = 64
NUM_LAYERS = 2
MAX_POS = 16
TYPE_VOCAB = 2
TOP_K = 8
LN_EPS = 1e-12
AGG = "max"            # model_config.AGG
NEG_INF = -1e9
ATTN_SCALE = 1.0 / math.sqrt(HEAD_DIM)
POOL_PAD = 128         # lane-dense pooled output width (sliced back on host)


# ----------------------------- in-kernel helpers -----------------------------
def _mm(a, b, trans_b=False):
    """MXU matmul: bf16 operands, f32 accumulation (cast is a no-op if bf16)."""
    dn = (((1,), (1 if trans_b else 0,)), ((), ()))
    return jax.lax.dot_general(a.astype(jnp.bfloat16), b.astype(jnp.bfloat16),
                               dn, preferred_element_type=jnp.float32)


def _layernorm(x, g, b):
    # E[x^2] - mu^2 form: the two lane reductions are independent.
    mu = jnp.mean(x, axis=-1, keepdims=True)
    ex2 = jnp.mean(x * x, axis=-1, keepdims=True)
    var = ex2 - mu * mu
    return (x - mu) * jax.lax.rsqrt(var + LN_EPS) * g + b


def _gelu(x):
    # TODO(synk): HF BERT default is erf-gelu; tanh approximation used for
    # Mosaic-safe transcendentals (EUP tanh), f32 elementwise math for v5e.
    return 0.5 * x * (1.0 + jnp.tanh(0.7978845608028654 * (x + 0.044715 * x * x * x)))


# ----------------------------- fused encoder kernel --------------------------
def _encoder_kernel(
    emb_ref, add_mask_ref, tok_mask_ref,
    emb_ln_g_ref, emb_ln_b_ref,
    qkv_w_ref, qkv_b_ref,
    ao_w_ref, ao_b_ref,
    attn_ln_g_ref, attn_ln_b_ref,
    i_w_ref, i_b_ref,
    o_w_ref, o_b_ref,
    out_ln_g_ref, out_ln_b_ref,
    mlm_w_ref, mlm_b_ref,
    mlm_ln_g_ref, mlm_ln_b_ref,
    dec_wt_ref, dec_b_ref,
    skip_ref,
    sparse_ref, pooled_ref,
    *, batch, seq, agg):
    NH, HD, H = NUM_HEADS, HEAD_DIM, HIDDEN

    # --- embedding LayerNorm (no residual input) ---
    h = _layernorm(emb_ref[...], emb_ln_g_ref[...], emb_ln_b_ref[...])

    # block-diagonal (batch, head) additive mask, precomputed on the host
    add_mask = add_mask_ref[...]                    # (B*NH*S, B*NH*S)

    # --- encoder layers: statically unrolled, weights VMEM-resident ---
    for l in range(NUM_LAYERS):
        # fused QKV projection on all B*S rows: (B*S, H) @ (H, 3H)
        qkv = (_mm(h, qkv_w_ref[l]) + qkv_b_ref[l]).astype(jnp.bfloat16)

        def gather(col0, _qkv=qkv):
            # stack all (batch, head) groups along sublanes: (B*NH*S, HD)
            return jnp.concatenate(
                [_qkv[b * seq:(b + 1) * seq,
                      col0 + hd * HD:col0 + (hd + 1) * HD]
                 for b in range(batch) for hd in range(NH)], axis=0)

        q_big = gather(0)
        k_big = gather(H)
        v_big = gather(2 * H)

        # one score matmul + one P@V matmul for ALL batches and heads
        s = _mm(q_big, k_big, trans_b=True) * ATTN_SCALE + add_mask
        s = s - jnp.max(s, axis=-1, keepdims=True)      # kept: NaN-safe for fully-masked rows
        e = jnp.exp(s)
        p = e * pl.reciprocal(jnp.sum(e, axis=-1, keepdims=True), approx=True)
        ctx_big = _mm(p, v_big)                          # (B*NH*S, HD) f32

        # reassemble (B*S, H): heads back to lanes, batches back to sublanes
        ctx = jnp.concatenate(
            [jnp.concatenate(
                [ctx_big[(b * NH + hd) * seq:(b * NH + hd + 1) * seq, :]
                 for hd in range(NH)], axis=1)
             for b in range(batch)], axis=0)

        attn_out = _mm(ctx, ao_w_ref[l]) + ao_b_ref[l]
        h = _layernorm(attn_out + h, attn_ln_g_ref[l], attn_ln_b_ref[l])

        inter = _gelu(_mm(h, i_w_ref[l]) + i_b_ref[l])
        ffn = _mm(inter, o_w_ref[l]) + o_b_ref[l]
        h = _layernorm(ffn + h, out_ln_g_ref[l], out_ln_b_ref[l])

    # pooled dense output: token 0 of the last hidden state, lane-padded to 128
    pooled = jnp.concatenate(
        [h[b * seq:b * seq + 1, :] for b in range(batch)], axis=0)   # (B, H)
    pooled_ref[...] = jnp.concatenate(
        [pooled, jnp.zeros((batch, POOL_PAD - H), jnp.float32)], axis=1)

    # --- MLM head: transform (dense + gelu + LN), tied decoder (lane-dense V) ---
    t = _gelu(_mm(h, mlm_w_ref[...]) + mlm_b_ref[...])
    t = _layernorm(t, mlm_ln_g_ref[...], mlm_ln_b_ref[...])
    logits = _mm(t, dec_wt_ref[...]) + dec_b_ref[...]                # (B*S, V)

    # --- SPLADE aggregation: log(1+relu(logits*skip)) * mask, reduce over seq ---
    lg = logits * skip_ref[...]
    tl = jnp.log(1.0 + jnp.maximum(lg, 0.0)) * tok_mask_ref[...]
    rows = []
    for b in range(batch):
        blk = tl[b * seq:(b + 1) * seq, :]
        if agg == "max":
            rows.append(jnp.max(blk, axis=0, keepdims=True))
        else:
            rows.append(jnp.sum(blk, axis=0, keepdims=True))
    sparse_ref[...] = jnp.concatenate(rows, axis=0)


# ----------------------------- params ----------------------------------------
def init_params(key):
    def nrm(k, shape):
        return 0.02 * jax.random.normal(k, shape, dtype=jnp.float32)

    keys = iter(jax.random.split(key, 8 + NUM_LAYERS * 8))
    p = {
        "word_emb": nrm(next(keys), (VOCAB, HIDDEN)),
        "pos_emb": nrm(next(keys), (MAX_POS, HIDDEN)),
        "type_emb": nrm(next(keys), (TYPE_VOCAB, HIDDEN)),
        "emb_ln_g": jnp.ones((HIDDEN,), jnp.float32),
        "emb_ln_b": jnp.zeros((HIDDEN,), jnp.float32),
        "mlm_dense_w": nrm(next(keys), (HIDDEN, HIDDEN)),
        "mlm_dense_b": jnp.zeros((HIDDEN,), jnp.float32),
        "mlm_ln_g": jnp.ones((HIDDEN,), jnp.float32),
        "mlm_ln_b": jnp.zeros((HIDDEN,), jnp.float32),
        "mlm_decoder_b": jnp.zeros((VOCAB,), jnp.float32),
        "layers": [],
    }
    for _ in range(NUM_LAYERS):
        layer = {
            "q_w": nrm(next(keys), (HIDDEN, HIDDEN)), "q_b": jnp.zeros((HIDDEN,), jnp.float32),
            "k_w": nrm(next(keys), (HIDDEN, HIDDEN)), "k_b": jnp.zeros((HIDDEN,), jnp.float32),
            "v_w": nrm(next(keys), (HIDDEN, HIDDEN)), "v_b": jnp.zeros((HIDDEN,), jnp.float32),
            "ao_w": nrm(next(keys), (HIDDEN, HIDDEN)), "ao_b": jnp.zeros((HIDDEN,), jnp.float32),
            "attn_ln_g": jnp.ones((HIDDEN,), jnp.float32),
            "attn_ln_b": jnp.zeros((HIDDEN,), jnp.float32),
            "i_w": nrm(next(keys), (HIDDEN, INTERMEDIATE)),
            "i_b": jnp.zeros((INTERMEDIATE,), jnp.float32),
            "o_w": nrm(next(keys), (INTERMEDIATE, HIDDEN)),
            "o_b": jnp.zeros((HIDDEN,), jnp.float32),
            "out_ln_g": jnp.ones((HIDDEN,), jnp.float32),
            "out_ln_b": jnp.zeros((HIDDEN,), jnp.float32),
        }
        p["layers"].append(layer)
    return p


def _stack(layers, name):
    return jnp.stack([l[name] for l in layers])


# ----------------------------- forward pass -----------------------------------
def hf_bert_encoder_for_mlm(params, input_ids, attention_mask, token_type_ids,
                            skip_mask, agg=AGG, top_k=TOP_K):
    B, S = input_ids.shape
    L, H, I, V = NUM_LAYERS, HIDDEN, INTERMEDIATE, VOCAB
    NH = NUM_HEADS
    bf16 = jnp.bfloat16
    attn_f = attention_mask.astype(jnp.float32)

    # --- embeddings (gather kept in plain JAX; LN fused into the kernel) ---
    we = params["word_emb"][input_ids]                                  # (B,S,H)
    pe = params["pos_emb"][jnp.arange(S)][None, :, :]                   # (1,S,H)
    te = params["type_emb"][token_type_ids]                             # (B,S,H)
    emb = (we + pe + te).reshape(B * S, H)

    # --- block-diagonal (batch, head) additive attention mask, host-side ---
    G = B * NH
    idx = jnp.arange(G * S)
    grp = idx // S                                   # group id per row/col
    col_batch = grp // NH
    col_pos = idx % S
    key_keep = attn_f[col_batch, col_pos]            # (G*S,) key padding keep
    allowed = (grp[:, None] == grp[None, :]) & (key_keep[None, :] > 0)
    add_mask = jnp.where(allowed, 0.0, NEG_INF).astype(jnp.float32)     # (G*S,G*S)

    tok_mask = attn_f.reshape(B * S, 1)              # per-token mask for SPLADE

    # --- stack per-layer weights (QKV fused to [H, 3H]); bf16 matmul weights ---
    layers = params["layers"]
    qkv_w = jnp.stack([jnp.concatenate([l["q_w"], l["k_w"], l["v_w"]], axis=1)
                       for l in layers]).astype(bf16)                   # (L,H,3H)
    qkv_b = jnp.stack([jnp.concatenate([l["q_b"], l["k_b"], l["v_b"]])[None, :]
                       for l in layers])                                # (L,1,3H)
    ao_w = _stack(layers, "ao_w").astype(bf16)                          # (L,H,H)
    ao_b = _stack(layers, "ao_b")[:, None, :]
    attn_ln_g = _stack(layers, "attn_ln_g")[:, None, :]
    attn_ln_b = _stack(layers, "attn_ln_b")[:, None, :]
    i_w = _stack(layers, "i_w").astype(bf16)                            # (L,H,I)
    i_b = _stack(layers, "i_b")[:, None, :]
    o_w = _stack(layers, "o_w").astype(bf16)                            # (L,I,H)
    o_b = _stack(layers, "o_b")[:, None, :]
    out_ln_g = _stack(layers, "out_ln_g")[:, None, :]
    out_ln_b = _stack(layers, "out_ln_b")[:, None, :]

    # tied decoder: one-time host transpose -> lane-dense (H, V) weight
    dec_wt = params["word_emb"].T.astype(bf16)                          # (H, V)

    kernel = functools.partial(_encoder_kernel, batch=B, seq=S, agg=agg)

    # Single kernel invocation (no grid): whole problem fits VMEM; all weights
    # resident, no per-batch grid-step overhead.
    sparse, pooled_pad = pl.pallas_call(
        kernel,
        out_shape=(jax.ShapeDtypeStruct((B, V), jnp.float32),
                   jax.ShapeDtypeStruct((B, POOL_PAD), jnp.float32)),
    )(emb, add_mask, tok_mask,
      params["emb_ln_g"].reshape(1, H), params["emb_ln_b"].reshape(1, H),
      qkv_w, qkv_b, ao_w, ao_b, attn_ln_g, attn_ln_b,
      i_w, i_b, o_w, o_b, out_ln_g, out_ln_b,
      params["mlm_dense_w"].astype(bf16), params["mlm_dense_b"].reshape(1, H),
      params["mlm_ln_g"].reshape(1, H), params["mlm_ln_b"].reshape(1, H),
      dec_wt, params["mlm_decoder_b"].reshape(1, V),
      skip_mask.reshape(1, V))

    pooled_dense = pooled_pad[:, :H]

    # --- top-k + scatter(ones) mask (plain JAX; no clean Pallas equivalent) ---
    topk_vals, topk_idx = jax.lax.top_k(sparse, top_k)
    rows = jnp.arange(B)[:, None]
    onehot = jnp.zeros_like(sparse).at[rows, topk_idx].set(1.0)
    top_sparse = sparse * onehot

    return top_sparse, pooled_dense


# ----------------------------- main -------------------------------------------
if __name__ == "__main__":
    root = jax.random.PRNGKey(0)
    k_params, k_ids = jax.random.split(root, 2)

    B, S = 2, 8
    params = init_params(k_params)

    input_ids = jax.random.randint(k_ids, (B, S), 0, VOCAB, dtype=jnp.int32)
    token_type_ids = jnp.zeros((B, S), dtype=jnp.int32)
    attention_mask = jnp.ones((B, S), dtype=jnp.float32).at[1, 6:].set(0.0)
    # skip_mask zeroes out "special" token logits (e.g. [CLS]/[SEP]/[PAD]/[MASK])
    skip_mask = jnp.ones((VOCAB,), jnp.float32).at[:4].set(0.0)

    fwd = jax.jit(hf_bert_encoder_for_mlm)
    top_sparse, pooled_dense = fwd(params, input_ids, attention_mask,
                                   token_type_ids, skip_mask)

    jax.block_until_ready((top_sparse, pooled_dense))
    assert top_sparse.shape == (B, VOCAB)
    assert pooled_dense.shape == (B, HIDDEN)
    print("KERNEL_OK")
</pallas_src>

<mosaic_0001>
module attributes {stable_mosaic.version = 11 : i64} {
  func.func @_encoder_kernel(%arg0: memref<16x32xf32, #tpu.memory_space<vmem>>, %arg1: memref<32x32xf32, #tpu.memory_space<vmem>>, %arg2: memref<16x1xf32, #tpu.memory_space<vmem>>, %arg3: memref<1x32xf32, #tpu.memory_space<vmem>>, %arg4: memref<1x32xf32, #tpu.memory_space<vmem>>, %arg5: memref<2x32x96xbf16, #tpu.memory_space<vmem>>, %arg6: memref<2x1x96xf32, #tpu.memory_space<vmem>>, %arg7: memref<2x32x32xbf16, #tpu.memory_space<vmem>>, %arg8: memref<2x1x32xf32, #tpu.memory_space<vmem>>, %arg9: memref<2x1x32xf32, #tpu.memory_space<vmem>>, %arg10: memref<2x1x32xf32, #tpu.memory_space<vmem>>, %arg11: memref<2x32x64xbf16, #tpu.memory_space<vmem>>, %arg12: memref<2x1x64xf32, #tpu.memory_space<vmem>>, %arg13: memref<2x64x32xbf16, #tpu.memory_space<vmem>>, %arg14: memref<2x1x32xf32, #tpu.memory_space<vmem>>, %arg15: memref<2x1x32xf32, #tpu.memory_space<vmem>>, %arg16: memref<2x1x32xf32, #tpu.memory_space<vmem>>, %arg17: memref<32x32xbf16, #tpu.memory_space<vmem>>, %arg18: memref<1x32xf32, #tpu.memory_space<vmem>>, %arg19: memref<1x32xf32, #tpu.memory_space<vmem>>, %arg20: memref<1x32xf32, #tpu.memory_space<vmem>>, %arg21: memref<32x128xbf16, #tpu.memory_space<vmem>>, %arg22: memref<1x128xf32, #tpu.memory_space<vmem>>, %arg23: memref<1x128xf32, #tpu.memory_space<vmem>>, %arg24: memref<2x128xf32, #tpu.memory_space<vmem>>, %arg25: memref<2x128xf32, #tpu.memory_space<vmem>>) attributes {dimension_semantics = [], scalar_prefetch = 0 : i64, scratch_operands = 0 : i64, tpu.core_type = #tpu.core_type<tc>} {
    %c0 = arith.constant 0 : index
    %c0_0 = arith.constant 0 : index
    %0 = vector.load %arg0[%c0, %c0_0] : memref<16x32xf32, #tpu.memory_space<vmem>>, vector<16x32xf32>
    %c0_1 = arith.constant 0 : index
    %c0_2 = arith.constant 0 : index
    %1 = vector.load %arg3[%c0_1, %c0_2] : memref<1x32xf32, #tpu.memory_space<vmem>>, vector<1x32xf32>
    %c0_3 = arith.constant 0 : index
    %c0_4 = arith.constant 0 : index
    %2 = vector.load %arg4[%c0_3, %c0_4] : memref<1x32xf32, #tpu.memory_space<vmem>>, vector<1x32xf32>
    %cst = arith.constant dense<0.000000e+00> : vector<16xf32>
    %3 = vector.multi_reduction <add>, %0, %cst [1] : vector<16x32xf32> to vector<16xf32>
    %4 = vector.shape_cast %3 : vector<16xf32> to vector<16x1xf32>
    %cst_5 = arith.constant 3.200000e+01 : f32
    %5 = vector.broadcast %cst_5 : f32 to vector<16x1xf32>
    %6 = arith.divf %4, %5 : vector<16x1xf32>
    %7 = arith.mulf %0, %0 : vector<16x32xf32>
    %cst_6 = arith.constant dense<0.000000e+00> : vector<16xf32>
    %8 = vector.multi_reduction <add>, %7, %cst_6 [1] : vector<16x32xf32> to vector<16xf32>
    %9 = vector.shape_cast %8 : vector<16xf32> to vector<16x1xf32>
    %cst_7 = arith.constant 3.200000e+01 : f32
    %10 = vector.broadcast %cst_7 : f32 to vector<16x1xf32>
    %11 = arith.divf %9, %10 : vector<16x1xf32>
    %12 = arith.mulf %6, %6 : vector<16x1xf32>
    %13 = arith.subf %11, %12 : vector<16x1xf32>
    %14 = vector.broadcast %6 : vector<16x1xf32> to vector<16x32xf32>
    %15 = arith.subf %0, %14 : vector<16x32xf32>
    %cst_8 = arith.constant 9.99999996E-13 : f32
    %16 = vector.broadcast %cst_8 : f32 to vector<16x1xf32>
    %17 = arith.addf %13, %16 : vector<16x1xf32>
    %18 = math.rsqrt %17 : vector<16x1xf32>
    %19 = vector.broadcast %18 : vector<16x1xf32> to vector<16x32xf32>
    %20 = arith.mulf %15, %19 : vector<16x32xf32>
    %21 = vector.broadcast %1 : vector<1x32xf32> to vector<16x32xf32>
    %22 = arith.mulf %20, %21 : vector<16x32xf32>
    %23 = vector.broadcast %2 : vector<1x32xf32> to vector<16x32xf32>
    %24 = arith.addf %22, %23 : vector<16x32xf32>
    %c0_9 = arith.constant 0 : index
    %c0_10 = arith.constant 0 : index
    %25 = vector.load %arg1[%c0_9, %c0_10] : memref<32x32xf32, #tpu.memory_space<vmem>>, vector<32x32xf32>
    %c0_11 = arith.constant 0 : index
    %c0_12 = arith.constant 0 : index
    %c0_13 = arith.constant 0 : index
    %26 = vector.load %arg5[%c0_11, %c0_12, %c0_13] : memref<2x32x96xbf16, #tpu.memory_space<vmem>>, vector<1x32x96xbf16>
    %27 = vector.shape_cast %26 : vector<1x32x96xbf16> to vector<32x96xbf16>
    %28 = arith.truncf %24 : vector<16x32xf32> to vector<16x32xbf16>
    %cst_14 = arith.constant dense<0.000000e+00> : vector<16x96xf32>
    %29 = tpu.matmul %28, %27, %cst_14 {dimension_numbers = #tpu.dot_dimension_numbers<[1], [0], [0], [1], [0, 0, 1, 1], [], []>} : vector<16x32xbf16>, vector<32x96xbf16>, vector<16x96xf32> -> vector<16x96xf32>
    %c0_15 = arith.constant 0 : index
    %c0_16 = arith.constant 0 : index
    %c0_17 = arith.constant 0 : index
    %30 = vector.load %arg6[%c0_15, %c0_16, %c0_17] : memref<2x1x96xf32, #tpu.memory_space<vmem>>, vector<1x1x96xf32>
    %31 = vector.shape_cast %30 : vector<1x1x96xf32> to vector<1x96xf32>
    %32 = vector.broadcast %31 : vector<1x96xf32> to vector<16x96xf32>
    %33 = arith.addf %29, %32 : vector<16x96xf32>
    %34 = arith.truncf %33 : vector<16x96xf32> to vector<16x96xbf16>
    %35 = vector.extract_strided_slice %34 {offsets = [0, 0], sizes = [8, 16], strides = [1, 1]} : vector<16x96xbf16> to vector<8x16xbf16>
    %36 = vector.extract_strided_slice %34 {offsets = [0, 16], sizes = [8, 16], strides = [1, 1]} : vector<16x96xbf16> to vector<8x16xbf16>
    %37 = vector.extract_strided_slice %34 {offsets = [8, 0], sizes = [8, 16], strides = [1, 1]} : vector<16x96xbf16> to vector<8x16xbf16>
    %38 = vector.extract_strided_slice %34 {offsets = [8, 16], sizes = [8, 16], strides = [1, 1]} : vector<16x96xbf16> to vector<8x16xbf16>
    %39 = tpu.concatenate %35, %36, %37, %38 in 0 : vector<8x16xbf16>, vector<8x16xbf16>, vector<8x16xbf16>, vector<8x16xbf16> -> vector<32x16xbf16>
    %40 = vector.extract_strided_slice %34 {offsets = [0, 32], sizes = [8, 16], strides = [1, 1]} : vector<16x96xbf16> to vector<8x16xbf16>
    %41 = vector.extract_strided_slice %34 {offsets = [0, 48], sizes = [8, 16], strides = [1, 1]} : vector<16x96xbf16> to vector<8x16xbf16>
    %42 = vector.extract_strided_slice %34 {offsets = [8, 32], sizes = [8, 16], strides = [1, 1]} : vector<16x96xbf16> to vector<8x16xbf16>
    %43 = vector.extract_strided_slice %34 {offsets = [8, 48], sizes = [8, 16], strides = [1, 1]} : vector<16x96xbf16> to vector<8x16xbf16>
    %44 = tpu.concatenate %40, %41, %42, %43 in 0 : vector<8x16xbf16>, vector<8x16xbf16>, vector<8x16xbf16>, vector<8x16xbf16> -> vector<32x16xbf16>
    %45 = vector.extract_strided_slice %34 {offsets = [0, 64], sizes = [8, 16], strides = [1, 1]} : vector<16x96xbf16> to vector<8x16xbf16>
    %46 = vector.extract_strided_slice %34 {offsets = [0, 80], sizes = [8, 16], strides = [1, 1]} : vector<16x96xbf16> to vector<8x16xbf16>
    %47 = vector.extract_strided_slice %34 {offsets = [8, 64], sizes = [8, 16], strides = [1, 1]} : vector<16x96xbf16> to vector<8x16xbf16>
    %48 = vector.extract_strided_slice %34 {offsets = [8, 80], sizes = [8, 16], strides = [1, 1]} : vector<16x96xbf16> to vector<8x16xbf16>
    %49 = tpu.concatenate %45, %46, %47, %48 in 0 : vector<8x16xbf16>, vector<8x16xbf16>, vector<8x16xbf16>, vector<8x16xbf16> -> vector<32x16xbf16>
    %cst_18 = arith.constant dense<0.000000e+00> : vector<32x32xf32>
    %50 = tpu.matmul %39, %44, %cst_18 {dimension_numbers = #tpu.dot_dimension_numbers<[1], [1], [0], [0], [0, 0, 1, 0], [], []>} : vector<32x16xbf16>, vector<32x16xbf16>, vector<32x32xf32> -> vector<32x32xf32>
    %cst_19 = arith.constant 2.500000e-01 : f32
    %51 = vector.broadcast %cst_19 : f32 to vector<32x32xf32>
    %52 = arith.mulf %50, %51 : vector<32x32xf32>
    %53 = arith.addf %52, %25 : vector<32x32xf32>
    %cst_20 = arith.constant dense<0xFF800000> : vector<32xf32>
    %54 = vector.multi_reduction <maximumf>, %53, %cst_20 [1] : vector<32x32xf32> to vector<32xf32>
    %55 = vector.shape_cast %54 : vector<32xf32> to vector<32x1xf32>
    %56 = vector.broadcast %55 : vector<32x1xf32> to vector<32x32xf32>
    %57 = arith.subf %53, %56 : vector<32x32xf32>
    %58 = math.exp %57 : vector<32x32xf32>
    %cst_21 = arith.constant dense<0.000000e+00> : vector<32xf32>
    %59 = vector.multi_reduction <add>, %58, %cst_21 [1] : vector<32x32xf32> to vector<32xf32>
    %60 = vector.shape_cast %59 : vector<32xf32> to vector<32x1xf32>
    %61 = tpu.reciprocal %60 {approx = true} : vector<32x1xf32> -> vector<32x1xf32>
    %62 = vector.broadcast %61 : vector<32x1xf32> to vector<32x32xf32>
    %63 = arith.mulf %58, %62 : vector<32x32xf32>
    %64 = arith.truncf %63 : vector<32x32xf32> to vector<32x32xbf16>
    %cst_22 = arith.constant dense<0.000000e+00> : vector<32x16xf32>
    %65 = tpu.matmul %64, %49, %cst_22 {dimension_numbers = #tpu.dot_dimension_numbers<[1], [0], [0], [1], [0, 0, 1, 1], [], []>} : vector<32x32xbf16>, vector<32x16xbf16>, vector<32x16xf32> -> vector<32x16xf32>
    %66 = vector.extract_strided_slice %65 {offsets = [0, 0], sizes = [8, 16], strides = [1, 1]} : vector<32x16xf32> to vector<8x16xf32>
    %67 = vector.extract_strided_slice %65 {offsets = [8, 0], sizes = [8, 16], strides = [1, 1]} : vector<32x16xf32> to vector<8x16xf32>
    %68 = tpu.concatenate %66, %67 in 1 : vector<8x16xf32>, vector<8x16xf32> -> vector<8x32xf32>
    %69 = vector.extract_strided_slice %65 {offsets = [16, 0], sizes = [8, 16], strides = [1, 1]} : vector<32x16xf32> to vector<8x16xf32>
    %70 = vector.extract_strided_slice %65 {offsets = [24, 0], sizes = [8, 16], strides = [1, 1]} : vector<32x16xf32> to vector<8x16xf32>
    %71 = tpu.concatenate %69, %70 in 1 : vector<8x16xf32>, vector<8x16xf32> -> vector<8x32xf32>
    %72 = tpu.concatenate %68, %71 in 0 : vector<8x32xf32>, vector<8x32xf32> -> vector<16x32xf32>
    %c0_23 = arith.constant 0 : index
    %c0_24 = arith.constant 0 : index
    %c0_25 = arith.constant 0 : index
    %73 = vector.load %arg7[%c0_23, %c0_24, %c0_25] : memref<2x32x32xbf16, #tpu.memory_space<vmem>>, vector<1x32x32xbf16>
    %74 = vector.shape_cast %73 : vector<1x32x32xbf16> to vector<32x32xbf16>
    %75 = arith.truncf %72 : vector<16x32xf32> to vector<16x32xbf16>
    %cst_26 = arith.constant dense<0.000000e+00> : vector<16x32xf32>
    %76 = tpu.matmul %75, %74, %cst_26 {dimension_numbers = #tpu.dot_dimension_numbers<[1], [0], [0], [1], [0, 0, 1, 1], [], []>} : vector<16x32xbf16>, vector<32x32xbf16>, vector<16x32xf32> -> vector<16x32xf32>
    %c0_27 = arith.constant 0 : index
    %c0_28 = arith.constant 0 : index
    %c0_29 = arith.constant 0 : index
    %77 = vector.load %arg8[%c0_27, %c0_28, %c0_29] : memref<2x1x32xf32, #tpu.memory_space<vmem>>, vector<1x1x32xf32>
    %78 = vector.shape_cast %77 : vector<1x1x32xf32> to vector<1x32xf32>
    %79 = vector.broadcast %78 : vector<1x32xf32> to vector<16x32xf32>
    %80 = arith.addf %76, %79 : vector<16x32xf32>
    %81 = arith.addf %80, %24 : vector<16x32xf32>
    %c0_30 = arith.constant 0 : index
    %c0_31 = arith.constant 0 : index
    %c0_32 = arith.constant 0 : index
    %82 = vector.load %arg9[%c0_30, %c0_31, %c0_32] : memref<2x1x32xf32, #tpu.memory_space<vmem>>, vector<1x1x32xf32>
    %83 = vector.shape_cast %82 : vector<1x1x32xf32> to vector<1x32xf32>
    %c0_33 = arith.constant 0 : index
    %c0_34 = arith.constant 0 : index
    %c0_35 = arith.constant 0 : index
    %84 = vector.load %arg10[%c0_33, %c0_34, %c0_35] : memref<2x1x32xf32, #tpu.memory_space<vmem>>, vector<1x1x32xf32>
    %85 = vector.shape_cast %84 : vector<1x1x32xf32> to vector<1x32xf32>
    %cst_36 = arith.constant dense<0.000000e+00> : vector<16xf32>
    %86 = vector.multi_reduction <add>, %81, %cst_36 [1] : vector<16x32xf32> to vector<16xf32>
    %87 = vector.shape_cast %86 : vector<16xf32> to vector<16x1xf32>
    %cst_37 = arith.constant 3.200000e+01 : f32
    %88 = vector.broadcast %cst_37 : f32 to vector<16x1xf32>
    %89 = arith.divf %87, %88 : vector<16x1xf32>
    %90 = arith.mulf %81, %81 : vector<16x32xf32>
    %cst_38 = arith.constant dense<0.000000e+00> : vector<16xf32>
    %91 = vector.multi_reduction <add>, %90, %cst_38 [1] : vector<16x32xf32> to vector<16xf32>
    %92 = vector.shape_cast %91 : vector<16xf32> to vector<16x1xf32>
    %cst_39 = arith.constant 3.200000e+01 : f32
    %93 = vector.broadcast %cst_39 : f32 to vector<16x1xf32>
    %94 = arith.divf %92, %93 : vector<16x1xf32>
    %95 = arith.mulf %89, %89 : vector<16x1xf32>
    %96 = arith.subf %94, %95 : vector<16x1xf32>
    %97 = vector.broadcast %89 : vector<16x1xf32> to vector<16x32xf32>
    %98 = arith.subf %81, %97 : vector<16x32xf32>
    %cst_40 = arith.constant 9.99999996E-13 : f32
    %99 = vector.broadcast %cst_40 : f32 to vector<16x1xf32>
    %100 = arith.addf %96, %99 : vector<16x1xf32>
    %101 = math.rsqrt %100 : vector<16x1xf32>
    %102 = vector.broadcast %101 : vector<16x1xf32> to vector<16x32xf32>
    %103 = arith.mulf %98, %102 : vector<16x32xf32>
    %104 = vector.broadcast %83 : vector<1x32xf32> to vector<16x32xf32>
    %105 = arith.mulf %103, %104 : vector<16x32xf32>
    %106 = vector.broadcast %85 : vector<1x32xf32> to vector<16x32xf32>
    %107 = arith.addf %105, %106 : vector<16x32xf32>
    %c0_41 = arith.constant 0 : index
    %c0_42 = arith.constant 0 : index
    %c0_43 = arith.constant 0 : index
    %108 = vector.load %arg11[%c0_41, %c0_42, %c0_43] : memref<2x32x64xbf16, #tpu.memory_space<vmem>>, vector<1x32x64xbf16>
    %109 = vector.shape_cast %108 : vector<1x32x64xbf16> to vector<32x64xbf16>
    %110 = arith.truncf %107 : vector<16x32xf32> to vector<16x32xbf16>
    %cst_44 = arith.constant dense<0.000000e+00> : vector<16x64xf32>
    %111 = tpu.matmul %110, %109, %cst_44 {dimension_numbers = #tpu.dot_dimension_numbers<[1], [0], [0], [1], [0, 0, 1, 1], [], []>} : vector<16x32xbf16>, vector<32x64xbf16>, vector<16x64xf32> -> vector<16x64xf32>
    %c0_45 = arith.constant 0 : index
    %c0_46 = arith.constant 0 : index
    %c0_47 = arith.constant 0 : index
    %112 = vector.load %arg12[%c0_45, %c0_46, %c0_47] : memref<2x1x64xf32, #tpu.memory_space<vmem>>, vector<1x1x64xf32>
    %113 = vector.shape_cast %112 : vector<1x1x64xf32> to vector<1x64xf32>
    %114 = vector.broadcast %113 : vector<1x64xf32> to vector<16x64xf32>
    %115 = arith.addf %111, %114 : vector<16x64xf32>
    %cst_48 = arith.constant 5.000000e-01 : f32
    %116 = vector.broadcast %cst_48 : f32 to vector<16x64xf32>
    %117 = arith.mulf %116, %115 : vector<16x64xf32>
    %cst_49 = arith.constant 4.471500e-02 : f32
    %118 = vector.broadcast %cst_49 : f32 to vector<16x64xf32>
    %119 = arith.mulf %118, %115 : vector<16x64xf32>
    %120 = arith.mulf %119, %115 : vector<16x64xf32>
    %121 = arith.mulf %120, %115 : vector<16x64xf32>
    %122 = arith.addf %115, %121 : vector<16x64xf32>
    %cst_50 = arith.constant 0.797884583 : f32
    %123 = vector.broadcast %cst_50 : f32 to vector<16x64xf32>
    %124 = arith.mulf %123, %122 : vector<16x64xf32>
    %125 = math.tanh %124 : vector<16x64xf32>
    %cst_51 = arith.constant 1.000000e+00 : f32
    %126 = vector.broadcast %cst_51 : f32 to vector<16x64xf32>
    %127 = arith.addf %126, %125 : vector<16x64xf32>
    %128 = arith.mulf %117, %127 : vector<16x64xf32>
    %c0_52 = arith.constant 0 : index
    %c0_53 = arith.constant 0 : index
    %c0_54 = arith.constant 0 : index
    %129 = vector.load %arg13[%c0_52, %c0_53, %c0_54] : memref<2x64x32xbf16, #tpu.memory_space<vmem>>, vector<1x64x32xbf16>
    %130 = vector.shape_cast %129 : vector<1x64x32xbf16> to vector<64x32xbf16>
    %131 = arith.truncf %128 : vector<16x64xf32> to vector<16x64xbf16>
    %cst_55 = arith.constant dense<0.000000e+00> : vector<16x32xf32>
    %132 = tpu.matmul %131, %130, %cst_55 {dimension_numbers = #tpu.dot_dimension_numbers<[1], [0], [0], [1], [0, 0, 1, 1], [], []>} : vector<16x64xbf16>, vector<64x32xbf16>, vector<16x32xf32> -> vector<16x32xf32>
    %c0_56 = arith.constant 0 : index
    %c0_57 = arith.constant 0 : index
    %c0_58 = arith.constant 0 : index
    %133 = vector.load %arg14[%c0_56, %c0_57, %c0_58] : memref<2x1x32xf32, #tpu.memory_space<vmem>>, vector<1x1x32xf32>
    %134 = vector.shape_cast %133 : vector<1x1x32xf32> to vector<1x32xf32>
    %135 = vector.broadcast %134 : vector<1x32xf32> to vector<16x32xf32>
    %136 = arith.addf %132, %135 : vector<16x32xf32>
    %137 = arith.addf %136, %107 : vector<16x32xf32>
    %c0_59 = arith.constant 0 : index
    %c0_60 = arith.constant 0 : index
    %c0_61 = arith.constant 0 : index
    %138 = vector.load %arg15[%c0_59, %c0_60, %c0_61] : memref<2x1x32xf32, #tpu.memory_space<vmem>>, vector<1x1x32xf32>
    %139 = vector.shape_cast %138 : vector<1x1x32xf32> to vector<1x32xf32>
    %c0_62 = arith.constant 0 : index
    %c0_63 = arith.constant 0 : index
    %c0_64 = arith.constant 0 : index
    %140 = vector.load %arg16[%c0_62, %c0_63, %c0_64] : memref<2x1x32xf32, #tpu.memory_space<vmem>>, vector<1x1x32xf32>
    %141 = vector.shape_cast %140 : vector<1x1x32xf32> to vector<1x32xf32>
    %cst_65 = arith.constant dense<0.000000e+00> : vector<16xf32>
    %142 = vector.multi_reduction <add>, %137, %cst_65 [1] : vector<16x32xf32> to vector<16xf32>
    %143 = vector.shape_cast %142 : vector<16xf32> to vector<16x1xf32>
    %cst_66 = arith.constant 3.200000e+01 : f32
    %144 = vector.broadcast %cst_66 : f32 to vector<16x1xf32>
    %145 = arith.divf %143, %144 : vector<16x1xf32>
    %146 = arith.mulf %137, %137 : vector<16x32xf32>
    %cst_67 = arith.constant dense<0.000000e+00> : vector<16xf32>
    %147 = vector.multi_reduction <add>, %146, %cst_67 [1] : vector<16x32xf32> to vector<16xf32>
    %148 = vector.shape_cast %147 : vector<16xf32> to vector<16x1xf32>
    %cst_68 = arith.constant 3.200000e+01 : f32
    %149 = vector.broadcast %cst_68 : f32 to vector<16x1xf32>
    %150 = arith.divf %148, %149 : vector<16x1xf32>
    %151 = arith.mulf %145, %145 : vector<16x1xf32>
    %152 = arith.subf %150, %151 : vector<16x1xf32>
    %153 = vector.broadcast %145 : vector<16x1xf32> to vector<16x32xf32>
    %154 = arith.subf %137, %153 : vector<16x32xf32>
    %cst_69 = arith.constant 9.99999996E-13 : f32
    %155 = vector.broadcast %cst_69 : f32 to vector<16x1xf32>
    %156 = arith.addf %152, %155 : vector<16x1xf32>
    %157 = math.rsqrt %156 : vector<16x1xf32>
    %158 = vector.broadcast %157 : vector<16x1xf32> to vector<16x32xf32>
    %159 = arith.mulf %154, %158 : vector<16x32xf32>
    %160 = vector.broadcast %139 : vector<1x32xf32> to vector<16x32xf32>
    %161 = arith.mulf %159, %160 : vector<16x32xf32>
    %162 = vector.broadcast %141 : vector<1x32xf32> to vector<16x32xf32>
    %163 = arith.addf %161, %162 : vector<16x32xf32>
    %c1 = arith.constant 1 : index
    %c0_70 = arith.constant 0 : index
    %c0_71 = arith.constant 0 : index
    %164 = vector.load %arg5[%c1, %c0_70, %c0_71] : memref<2x32x96xbf16, #tpu.memory_space<vmem>>, vector<1x32x96xbf16>
    %165 = vector.shape_cast %164 : vector<1x32x96xbf16> to vector<32x96xbf16>
    %166 = arith.truncf %163 : vector<16x32xf32> to vector<16x32xbf16>
    %cst_72 = arith.constant dense<0.000000e+00> : vector<16x96xf32>
    %167 = tpu.matmul %166, %165, %cst_72 {dimension_numbers = #tpu.dot_dimension_numbers<[1], [0], [0], [1], [0, 0, 1, 1], [], []>} : vector<16x32xbf16>, vector<32x96xbf16>, vector<16x96xf32> -> vector<16x96xf32>
    %c1_73 = arith.constant 1 : index
    %c0_74 = arith.constant 0 : index
    %c0_75 = arith.constant 0 : index
    %168 = vector.load %arg6[%c1_73, %c0_74, %c0_75] : memref<2x1x96xf32, #tpu.memory_space<vmem>>, vector<1x1x96xf32>
    %169 = vector.shape_cast %168 : vector<1x1x96xf32> to vector<1x96xf32>
    %170 = vector.broadcast %169 : vector<1x96xf32> to vector<16x96xf32>
    %171 = arith.addf %167, %170 : vector<16x96xf32>
    %172 = arith.truncf %171 : vector<16x96xf32> to vector<16x96xbf16>
    %173 = vector.extract_strided_slice %172 {offsets = [0, 0], sizes = [8, 16], strides = [1, 1]} : vector<16x96xbf16> to vector<8x16xbf16>
    %174 = vector.extract_strided_slice %172 {offsets = [0, 16], sizes = [8, 16], strides = [1, 1]} : vector<16x96xbf16> to vector<8x16xbf16>
    %175 = vector.extract_strided_slice %172 {offsets = [8, 0], sizes = [8, 16], strides = [1, 1]} : vector<16x96xbf16> to vector<8x16xbf16>
    %176 = vector.extract_strided_slice %172 {offsets = [8, 16], sizes = [8, 16], strides = [1, 1]} : vector<16x96xbf16> to vector<8x16xbf16>
    %177 = tpu.concatenate %173, %174, %175, %176 in 0 : vector<8x16xbf16>, vector<8x16xbf16>, vector<8x16xbf16>, vector<8x16xbf16> -> vector<32x16xbf16>
    %178 = vector.extract_strided_slice %172 {offsets = [0, 32], sizes = [8, 16], strides = [1, 1]} : vector<16x96xbf16> to vector<8x16xbf16>
    %179 = vector.extract_strided_slice %172 {offsets = [0, 48], sizes = [8, 16], strides = [1, 1]} : vector<16x96xbf16> to vector<8x16xbf16>
    %180 = vector.extract_strided_slice %172 {offsets = [8, 32], sizes = [8, 16], strides = [1, 1]} : vector<16x96xbf16> to vector<8x16xbf16>
    %181 = vector.extract_strided_slice %172 {offsets = [8, 48], sizes = [8, 16], strides = [1, 1]} : vector<16x96xbf16> to vector<8x16xbf16>
    %182 = tpu.concatenate %178, %179, %180, %181 in 0 : vector<8x16xbf16>, vector<8x16xbf16>, vector<8x16xbf16>, vector<8x16xbf16> -> vector<32x16xbf16>
    %183 = vector.extract_strided_slice %172 {offsets = [0, 64], sizes = [8, 16], strides = [1, 1]} : vector<16x96xbf16> to vector<8x16xbf16>
    %184 = vector.extract_strided_slice %172 {offsets = [0, 80], sizes = [8, 16], strides = [1, 1]} : vector<16x96xbf16> to vector<8x16xbf16>
    %185 = vector.extract_strided_slice %172 {offsets = [8, 64], sizes = [8, 16], strides = [1, 1]} : vector<16x96xbf16> to vector<8x16xbf16>
    %186 = vector.extract_strided_slice %172 {offsets = [8, 80], sizes = [8, 16], strides = [1, 1]} : vector<16x96xbf16> to vector<8x16xbf16>
    %187 = tpu.concatenate %183, %184, %185, %186 in 0 : vector<8x16xbf16>, vector<8x16xbf16>, vector<8x16xbf16>, vector<8x16xbf16> -> vector<32x16xbf16>
    %cst_76 = arith.constant dense<0.000000e+00> : vector<32x32xf32>
    %188 = tpu.matmul %177, %182, %cst_76 {dimension_numbers = #tpu.dot_dimension_numbers<[1], [1], [0], [0], [0, 0, 1, 0], [], []>} : vector<32x16xbf16>, vector<32x16xbf16>, vector<32x32xf32> -> vector<32x32xf32>
    %cst_77 = arith.constant 2.500000e-01 : f32
    %189 = vector.broadcast %cst_77 : f32 to vector<32x32xf32>
    %190 = arith.mulf %188, %189 : vector<32x32xf32>
    %191 = arith.addf %190, %25 : vector<32x32xf32>
    %cst_78 = arith.constant dense<0xFF800000> : vector<32xf32>
    %192 = vector.multi_reduction <maximumf>, %191, %cst_78 [1] : vector<32x32xf32> to vector<32xf32>
    %193 = vector.shape_cast %192 : vector<32xf32> to vector<32x1xf32>
    %194 = vector.broadcast %193 : vector<32x1xf32> to vector<32x32xf32>
    %195 = arith.subf %191, %194 : vector<32x32xf32>
    %196 = math.exp %195 : vector<32x32xf32>
    %cst_79 = arith.constant dense<0.000000e+00> : vector<32xf32>
    %197 = vector.multi_reduction <add>, %196, %cst_79 [1] : vector<32x32xf32> to vector<32xf32>
    %198 = vector.shape_cast %197 : vector<32xf32> to vector<32x1xf32>
    %199 = tpu.reciprocal %198 {approx = true} : vector<32x1xf32> -> vector<32x1xf32>
    %200 = vector.broadcast %199 : vector<32x1xf32> to vector<32x32xf32>
    %201 = arith.mulf %196, %200 : vector<32x32xf32>
    %202 = arith.truncf %201 : vector<32x32xf32> to vector<32x32xbf16>
    %cst_80 = arith.constant dense<0.000000e+00> : vector<32x16xf32>
    %203 = tpu.matmul %202, %187, %cst_80 {dimension_numbers = #tpu.dot_dimension_numbers<[1], [0], [0], [1], [0, 0, 1, 1], [], []>} : vector<32x32xbf16>, vector<32x16xbf16>, vector<32x16xf32> -> vector<32x16xf32>
    %204 = vector.extract_strided_slice %203 {offsets = [0, 0], sizes = [8, 16], strides = [1, 1]} : vector<32x16xf32> to vector<8x16xf32>
    %205 = vector.extract_strided_slice %203 {offsets = [8, 0], sizes = [8, 16], strides = [1, 1]} : vector<32x16xf32> to vector<8x16xf32>
    %206 = tpu.concatenate %204, %205 in 1 : vector<8x16xf32>, vector<8x16xf32> -> vector<8x32xf32>
    %207 = vector.extract_strided_slice %203 {offsets = [16, 0], sizes = [8, 16], strides = [1, 1]} : vector<32x16xf32> to vector<8x16xf32>
    %208 = vector.extract_strided_slice %203 {offsets = [24, 0], sizes = [8, 16], strides = [1, 1]} : vector<32x16xf32> to vector<8x16xf32>
    %209 = tpu.concatenate %207, %208 in 1 : vector<8x16xf32>, vector<8x16xf32> -> vector<8x32xf32>
    %210 = tpu.concatenate %206, %209 in 0 : vector<8x32xf32>, vector<8x32xf32> -> vector<16x32xf32>
    %c1_81 = arith.constant 1 : index
    %c0_82 = arith.constant 0 : index
    %c0_83 = arith.constant 0 : index
    %211 = vector.load %arg7[%c1_81, %c0_82, %c0_83] : memref<2x32x32xbf16, #tpu.memory_space<vmem>>, vector<1x32x32xbf16>
    %212 = vector.shape_cast %211 : vector<1x32x32xbf16> to vector<32x32xbf16>
    %213 = arith.truncf %210 : vector<16x32xf32> to vector<16x32xbf16>
    %cst_84 = arith.constant dense<0.000000e+00> : vector<16x32xf32>
    %214 = tpu.matmul %213, %212, %cst_84 {dimension_numbers = #tpu.dot_dimension_numbers<[1], [0], [0], [1], [0, 0, 1, 1], [], []>} : vector<16x32xbf16>, vector<32x32xbf16>, vector<16x32xf32> -> vector<16x32xf32>
    %c1_85 = arith.constant 1 : index
    %c0_86 = arith.constant 0 : index
    %c0_87 = arith.constant 0 : index
    %215 = vector.load %arg8[%c1_85, %c0_86, %c0_87] : memref<2x1x32xf32, #tpu.memory_space<vmem>>, vector<1x1x32xf32>
    %216 = vector.shape_cast %215 : vector<1x1x32xf32> to vector<1x32xf32>
    %217 = vector.broadcast %216 : vector<1x32xf32> to vector<16x32xf32>
    %218 = arith.addf %214, %217 : vector<16x32xf32>
    %219 = arith.addf %218, %163 : vector<16x32xf32>
    %c1_88 = arith.constant 1 : index
    %c0_89 = arith.constant 0 : index
    %c0_90 = arith.constant 0 : index
    %220 = vector.load %arg9[%c1_88, %c0_89, %c0_90] : memref<2x1x32xf32, #tpu.memory_space<vmem>>, vector<1x1x32xf32>
    %221 = vector.shape_cast %220 : vector<1x1x32xf32> to vector<1x32xf32>
    %c1_91 = arith.constant 1 : index
    %c0_92 = arith.constant 0 : index
    %c0_93 = arith.constant 0 : index
    %222 = vector.load %arg10[%c1_91, %c0_92, %c0_93] : memref<2x1x32xf32, #tpu.memory_space<vmem>>, vector<1x1x32xf32>
    %223 = vector.shape_cast %222 : vector<1x1x32xf32> to vector<1x32xf32>
    %cst_94 = arith.constant dense<0.000000e+00> : vector<16xf32>
    %224 = vector.multi_reduction <add>, %219, %cst_94 [1] : vector<16x32xf32> to vector<16xf32>
    %225 = vector.shape_cast %224 : vector<16xf32> to vector<16x1xf32>
    %cst_95 = arith.constant 3.200000e+01 : f32
    %226 = vector.broadcast %cst_95 : f32 to vector<16x1xf32>
    %227 = arith.divf %225, %226 : vector<16x1xf32>
    %228 = arith.mulf %219, %219 : vector<16x32xf32>
    %cst_96 = arith.constant dense<0.000000e+00> : vector<16xf32>
    %229 = vector.multi_reduction <add>, %228, %cst_96 [1] : vector<16x32xf32> to vector<16xf32>
    %230 = vector.shape_cast %229 : vector<16xf32> to vector<16x1xf32>
    %cst_97 = arith.constant 3.200000e+01 : f32
    %231 = vector.broadcast %cst_97 : f32 to vector<16x1xf32>
    %232 = arith.divf %230, %231 : vector<16x1xf32>
    %233 = arith.mulf %227, %227 : vector<16x1xf32>
    %234 = arith.subf %232, %233 : vector<16x1xf32>
    %235 = vector.broadcast %227 : vector<16x1xf32> to vector<16x32xf32>
    %236 = arith.subf %219, %235 : vector<16x32xf32>
    %cst_98 = arith.constant 9.99999996E-13 : f32
    %237 = vector.broadcast %cst_98 : f32 to vector<16x1xf32>
    %238 = arith.addf %234, %237 : vector<16x1xf32>
    %239 = math.rsqrt %238 : vector<16x1xf32>
    %240 = vector.broadcast %239 : vector<16x1xf32> to vector<16x32xf32>
    %241 = arith.mulf %236, %240 : vector<16x32xf32>
    %242 = vector.broadcast %221 : vector<1x32xf32> to vector<16x32xf32>
    %243 = arith.mulf %241, %242 : vector<16x32xf32>
    %244 = vector.broadcast %223 : vector<1x32xf32> to vector<16x32xf32>
    %245 = arith.addf %243, %244 : vector<16x32xf32>
    %c1_99 = arith.constant 1 : index
    %c0_100 = arith.constant 0 : index
    %c0_101 = arith.constant 0 : index
    %246 = vector.load %arg11[%c1_99, %c0_100, %c0_101] : memref<2x32x64xbf16, #tpu.memory_space<vmem>>, vector<1x32x64xbf16>
    %247 = vector.shape_cast %246 : vector<1x32x64xbf16> to vector<32x64xbf16>
    %248 = arith.truncf %245 : vector<16x32xf32> to vector<16x32xbf16>
    %cst_102 = arith.constant dense<0.000000e+00> : vector<16x64xf32>
    %249 = tpu.matmul %248, %247, %cst_102 {dimension_numbers = #tpu.dot_dimension_numbers<[1], [0], [0], [1], [0, 0, 1, 1], [], []>} : vector<16x32xbf16>, vector<32x64xbf16>, vector<16x64xf32> -> vector<16x64xf32>
    %c1_103 = arith.constant 1 : index
    %c0_104 = arith.constant 0 : index
    %c0_105 = arith.constant 0 : index
    %250 = vector.load %arg12[%c1_103, %c0_104, %c0_105] : memref<2x1x64xf32, #tpu.memory_space<vmem>>, vector<1x1x64xf32>
    %251 = vector.shape_cast %250 : vector<1x1x64xf32> to vector<1x64xf32>
    %252 = vector.broadcast %251 : vector<1x64xf32> to vector<16x64xf32>
    %253 = arith.addf %249, %252 : vector<16x64xf32>
    %cst_106 = arith.constant 5.000000e-01 : f32
    %254 = vector.broadcast %cst_106 : f32 to vector<16x64xf32>
    %255 = arith.mulf %254, %253 : vector<16x64xf32>
    %cst_107 = arith.constant 4.471500e-02 : f32
    %256 = vector.broadcast %cst_107 : f32 to vector<16x64xf32>
    %257 = arith.mulf %256, %253 : vector<16x64xf32>
    %258 = arith.mulf %257, %253 : vector<16x64xf32>
    %259 = arith.mulf %258, %253 : vector<16x64xf32>
    %260 = arith.addf %253, %259 : vector<16x64xf32>
    %cst_108 = arith.constant 0.797884583 : f32
    %261 = vector.broadcast %cst_108 : f32 to vector<16x64xf32>
    %262 = arith.mulf %261, %260 : vector<16x64xf32>
    %263 = math.tanh %262 : vector<16x64xf32>
    %cst_109 = arith.constant 1.000000e+00 : f32
    %264 = vector.broadcast %cst_109 : f32 to vector<16x64xf32>
    %265 = arith.addf %264, %263 : vector<16x64xf32>
    %266 = arith.mulf %255, %265 : vector<16x64xf32>
    %c1_110 = arith.constant 1 : index
    %c0_111 = arith.constant 0 : index
    %c0_112 = arith.constant 0 : index
    %267 = vector.load %arg13[%c1_110, %c0_111, %c0_112] : memref<2x64x32xbf16, #tpu.memory_space<vmem>>, vector<1x64x32xbf16>
    %268 = vector.shape_cast %267 : vector<1x64x32xbf16> to vector<64x32xbf16>
    %269 = arith.truncf %266 : vector<16x64xf32> to vector<16x64xbf16>
    %cst_113 = arith.constant dense<0.000000e+00> : vector<16x32xf32>
    %270 = tpu.matmul %269, %268, %cst_113 {dimension_numbers = #tpu.dot_dimension_numbers<[1], [0], [0], [1], [0, 0, 1, 1], [], []>} : vector<16x64xbf16>, vector<64x32xbf16>, vector<16x32xf32> -> vector<16x32xf32>
    %c1_114 = arith.constant 1 : index
    %c0_115 = arith.constant 0 : index
    %c0_116 = arith.constant 0 : index
    %271 = vector.load %arg14[%c1_114, %c0_115, %c0_116] : memref<2x1x32xf32, #tpu.memory_space<vmem>>, vector<1x1x32xf32>
    %272 = vector.shape_cast %271 : vector<1x1x32xf32> to vector<1x32xf32>
    %273 = vector.broadcast %272 : vector<1x32xf32> to vector<16x32xf32>
    %274 = arith.addf %270, %273 : vector<16x32xf32>
    %275 = arith.addf %274, %245 : vector<16x32xf32>
    %c1_117 = arith.constant 1 : index
    %c0_118 = arith.constant 0 : index
    %c0_119 = arith.constant 0 : index
    %276 = vector.load %arg15[%c1_117, %c0_118, %c0_119] : memref<2x1x32xf32, #tpu.memory_space<vmem>>, vector<1x1x32xf32>
    %277 = vector.shape_cast %276 : vector<1x1x32xf32> to vector<1x32xf32>
    %c1_120 = arith.constant 1 : index
    %c0_121 = arith.constant 0 : index
    %c0_122 = arith.constant 0 : index
    %278 = vector.load %arg16[%c1_120, %c0_121, %c0_122] : memref<2x1x32xf32, #tpu.memory_space<vmem>>, vector<1x1x32xf32>
    %279 = vector.shape_cast %278 : vector<1x1x32xf32> to vector<1x32xf32>
    %cst_123 = arith.constant dense<0.000000e+00> : vector<16xf32>
    %280 = vector.multi_reduction <add>, %275, %cst_123 [1] : vector<16x32xf32> to vector<16xf32>
    %281 = vector.shape_cast %280 : vector<16xf32> to vector<16x1xf32>
    %cst_124 = arith.constant 3.200000e+01 : f32
    %282 = vector.broadcast %cst_124 : f32 to vector<16x1xf32>
    %283 = arith.divf %281, %282 : vector<16x1xf32>
    %284 = arith.mulf %275, %275 : vector<16x32xf32>
    %cst_125 = arith.constant dense<0.000000e+00> : vector<16xf32>
    %285 = vector.multi_reduction <add>, %284, %cst_125 [1] : vector<16x32xf32> to vector<16xf32>
    %286 = vector.shape_cast %285 : vector<16xf32> to vector<16x1xf32>
    %cst_126 = arith.constant 3.200000e+01 : f32
    %287 = vector.broadcast %cst_126 : f32 to vector<16x1xf32>
    %288 = arith.divf %286, %287 : vector<16x1xf32>
    %289 = arith.mulf %283, %283 : vector<16x1xf32>
    %290 = arith.subf %288, %289 : vector<16x1xf32>
    %291 = vector.broadcast %283 : vector<16x1xf32> to vector<16x32xf32>
    %292 = arith.subf %275, %291 : vector<16x32xf32>
    %cst_127 = arith.constant 9.99999996E-13 : f32
    %293 = vector.broadcast %cst_127 : f32 to vector<16x1xf32>
    %294 = arith.addf %290, %293 : vector<16x1xf32>
    %295 = math.rsqrt %294 : vector<16x1xf32>
    %296 = vector.broadcast %295 : vector<16x1xf32> to vector<16x32xf32>
    %297 = arith.mulf %292, %296 : vector<16x32xf32>
    %298 = vector.broadcast %277 : vector<1x32xf32> to vector<16x32xf32>
    %299 = arith.mulf %297, %298 : vector<16x32xf32>
    %300 = vector.broadcast %279 : vector<1x32xf32> to vector<16x32xf32>
    %301 = arith.addf %299, %300 : vector<16x32xf32>
    %302 = vector.extract_strided_slice %301 {offsets = [0, 0], sizes = [1, 32], strides = [1, 1]} : vector<16x32xf32> to vector<1x32xf32>
    %303 = vector.extract_strided_slice %301 {offsets = [8, 0], sizes = [1, 32], strides = [1, 1]} : vector<16x32xf32> to vector<1x32xf32>
    %304 = tpu.concatenate %302, %303 in 0 : vector<1x32xf32>, vector<1x32xf32> -> vector<2x32xf32>
    %cst_128 = arith.constant 0.000000e+00 : f32
    %305 = vector.broadcast %cst_128 : f32 to vector<2x96xf32>
    %306 = tpu.concatenate %304, %305 in 1 : vector<2x32xf32>, vector<2x96xf32> -> vector<2x128xf32>
    %c0_129 = arith.constant 0 : index
    %c0_130 = arith.constant 0 : index
    %307 = vector.load %arg25[%c0_129, %c0_130] : memref<2x128xf32, #tpu.memory_space<vmem>>, vector<2x128xf32>
    tpu.vector_store %arg25[%c0_129, %c0_130], %306 {strides = array<i32>} : memref<2x128xf32, #tpu.memory_space<vmem>>, vector<2x128xf32>,
    %c0_131 = arith.constant 0 : index
    %c0_132 = arith.constant 0 : index
    %308 = vector.load %arg17[%c0_131, %c0_132] : memref<32x32xbf16, #tpu.memory_space<vmem>>, vector<32x32xbf16>
    %309 = arith.truncf %301 : vector<16x32xf32> to vector<16x32xbf16>
    %cst_133 = arith.constant dense<0.000000e+00> : vector<16x32xf32>
    %310 = tpu.matmul %309, %308, %cst_133 {dimension_numbers = #tpu.dot_dimension_numbers<[1], [0], [0], [1], [0, 0, 1, 1], [], []>} : vector<16x32xbf16>, vector<32x32xbf16>, vector<16x32xf32> -> vector<16x32xf32>
    %c0_134 = arith.constant 0 : index
    %c0_135 = arith.constant 0 : index
    %311 = vector.load %arg18[%c0_134, %c0_135] : memref<1x32xf32, #tpu.memory_space<vmem>>, vector<1x32xf32>
    %312 = vector.broadcast %311 : vector<1x32xf32> to vector<16x32xf32>
    %313 = arith.addf %310, %312 : vector<16x32xf32>
    %cst_136 = arith.constant 5.000000e-01 : f32
    %314 = vector.broadcast %cst_136 : f32 to vector<16x32xf32>
    %315 = arith.mulf %314, %313 : vector<16x32xf32>
    %cst_137 = arith.constant 4.471500e-02 : f32
    %316 = vector.broadcast %cst_137 : f32 to vector<16x32xf32>
    %317 = arith.mulf %316, %313 : vector<16x32xf32>
    %318 = arith.mulf %317, %313 : vector<16x32xf32>
    %319 = arith.mulf %318, %313 : vector<16x32xf32>
    %320 = arith.addf %313, %319 : vector<16x32xf32>
    %cst_138 = arith.constant 0.797884583 : f32
    %321 = vector.broadcast %cst_138 : f32 to vector<16x32xf32>
    %322 = arith.mulf %321, %320 : vector<16x32xf32>
    %323 = math.tanh %322 : vector<16x32xf32>
    %cst_139 = arith.constant 1.000000e+00 : f32
    %324 = vector.broadcast %cst_139 : f32 to vector<16x32xf32>
    %325 = arith.addf %324, %323 : vector<16x32xf32>
    %326 = arith.mulf %315, %325 : vector<16x32xf32>
    %c0_140 = arith.constant 0 : index
    %c0_141 = arith.constant 0 : index
    %327 = vector.load %arg19[%c0_140, %c0_141] : memref<1x32xf32, #tpu.memory_space<vmem>>, vector<1x32xf32>
    %c0_142 = arith.constant 0 : index
    %c0_143 = arith.constant 0 : index
    %328 = vector.load %arg20[%c0_142, %c0_143] : memref<1x32xf32, #tpu.memory_space<vmem>>, vector<1x32xf32>
    %cst_144 = arith.constant dense<0.000000e+00> : vector<16xf32>
    %329 = vector.multi_reduction <add>, %326, %cst_144 [1] : vector<16x32xf32> to vector<16xf32>
    %330 = vector.shape_cast %329 : vector<16xf32> to vector<16x1xf32>
    %cst_145 = arith.constant 3.200000e+01 : f32
    %331 = vector.broadcast %cst_145 : f32 to vector<16x1xf32>
    %332 = arith.divf %330, %331 : vector<16x1xf32>
    %333 = arith.mulf %326, %326 : vector<16x32xf32>
    %cst_146 = arith.constant dense<0.000000e+00> : vector<16xf32>
    %334 = vector.multi_reduction <add>, %333, %cst_146 [1] : vector<16x32xf32> to vector<16xf32>
    %335 = vector.shape_cast %334 : vector<16xf32> to vector<16x1xf32>
    %cst_147 = arith.constant 3.200000e+01 : f32
    %336 = vector.broadcast %cst_147 : f32 to vector<16x1xf32>
    %337 = arith.divf %335, %336 : vector<16x1xf32>
    %338 = arith.mulf %332, %332 : vector<16x1xf32>
    %339 = arith.subf %337, %338 : vector<16x1xf32>
    %340 = vector.broadcast %332 : vector<16x1xf32> to vector<16x32xf32>
    %341 = arith.subf %326, %340 : vector<16x32xf32>
    %cst_148 = arith.constant 9.99999996E-13 : f32
    %342 = vector.broadcast %cst_148 : f32 to vector<16x1xf32>
    %343 = arith.addf %339, %342 : vector<16x1xf32>
    %344 = math.rsqrt %343 : vector<16x1xf32>
    %345 = vector.broadcast %344 : vector<16x1xf32> to vector<16x32xf32>
    %346 = arith.mulf %341, %345 : vector<16x32xf32>
    %347 = vector.broadcast %327 : vector<1x32xf32> to vector<16x32xf32>
    %348 = arith.mulf %346, %347 : vector<16x32xf32>
    %349 = vector.broadcast %328 : vector<1x32xf32> to vector<16x32xf32>
    %350 = arith.addf %348, %349 : vector<16x32xf32>
    %c0_149 = arith.constant 0 : index
    %c0_150 = arith.constant 0 : index
    %351 = vector.load %arg21[%c0_149, %c0_150] : memref<32x128xbf16, #tpu.memory_space<vmem>>, vector<32x128xbf16>
    %352 = arith.truncf %350 : vector<16x32xf32> to vector<16x32xbf16>
    %cst_151 = arith.constant dense<0.000000e+00> : vector<16x128xf32>
    %353 = tpu.matmul %352, %351, %cst_151 {dimension_numbers = #tpu.dot_dimension_numbers<[1], [0], [0], [1], [0, 0, 1, 1], [], []>} : vector<16x32xbf16>, vector<32x128xbf16>, vector<16x128xf32> -> vector<16x128xf32>
    %c0_152 = arith.constant 0 : index
    %c0_153 = arith.constant 0 : index
    %354 = vector.load %arg22[%c0_152, %c0_153] : memref<1x128xf32, #tpu.memory_space<vmem>>, vector<1x128xf32>
    %355 = vector.broadcast %354 : vector<1x128xf32> to vector<16x128xf32>
    %356 = arith.addf %353, %355 : vector<16x128xf32>
    %c0_154 = arith.constant 0 : index
    %c0_155 = arith.constant 0 : index
    %357 = vector.load %arg23[%c0_154, %c0_155] : memref<1x128xf32, #tpu.memory_space<vmem>>, vector<1x128xf32>
    %358 = vector.broadcast %357 : vector<1x128xf32> to vector<16x128xf32>
    %359 = arith.mulf %356, %358 : vector<16x128xf32>
    %cst_156 = arith.constant 0.000000e+00 : f32
    %360 = vector.broadcast %cst_156 : f32 to vector<16x128xf32>
    %361 = arith.maximumf %359, %360 : vector<16x128xf32>
    %cst_157 = arith.constant 1.000000e+00 : f32
    %362 = vector.broadcast %cst_157 : f32 to vector<16x128xf32>
    %363 = arith.addf %362, %361 : vector<16x128xf32>
    %364 = math.log %363 : vector<16x128xf32>
    %c0_158 = arith.constant 0 : index
    %c0_159 = arith.constant 0 : index
    %365 = vector.load %arg2[%c0_158, %c0_159] : memref<16x1xf32, #tpu.memory_space<vmem>>, vector<16x1xf32>
    %366 = vector.broadcast %365 : vector<16x1xf32> to vector<16x128xf32>
    %367 = arith.mulf %364, %366 : vector<16x128xf32>
    %368 = vector.extract_strided_slice %367 {offsets = [0, 0], sizes = [8, 128], strides = [1, 1]} : vector<16x128xf32> to vector<8x128xf32>
    %cst_160 = arith.constant dense<0xFF800000> : vector<128xf32>
    %369 = vector.multi_reduction <maximumf>, %368, %cst_160 [0] : vector<8x128xf32> to vector<128xf32>
    %370 = vector.shape_cast %369 : vector<128xf32> to vector<1x128xf32>
    %371 = vector.extract_strided_slice %367 {offsets = [8, 0], sizes = [8, 128], strides = [1, 1]} : vector<16x128xf32> to vector<8x128xf32>
    %cst_161 = arith.constant dense<0xFF800000> : vector<128xf32>
    %372 = vector.multi_reduction <maximumf>, %371, %cst_161 [0] : vector<8x128xf32> to vector<128xf32>
    %373 = vector.shape_cast %372 : vector<128xf32> to vector<1x128xf32>
    %374 = tpu.concatenate %370, %373 in 0 : vector<1x128xf32>, vector<1x128xf32> -> vector<2x128xf32>
    %c0_162 = arith.constant 0 : index
    %c0_163 = arith.constant 0 : index
    %375 = vector.load %arg24[%c0_162, %c0_163] : memref<2x128xf32, #tpu.memory_space<vmem>>, vector<2x128xf32>
    tpu.vector_store %arg24[%c0_162, %c0_163], %374 {strides = array<i32>} : memref<2x128xf32, #tpu.memory_space<vmem>>, vector<2x128xf32>,
    return
  }
}

</mosaic_0001>

<llo_original>
// kernel: mul.1
$region0: #{mul.1}
  #allocation2 [shape = 's32[1]{0}', space=sflag, size = 0x4, scoped, tag = 'scoped memory for mul.1']
  %s0 = inlined_call_operand.vmem [shape: f32[2,128], index: 0, kind: input, shape index: {}]
  %s1 = inlined_call_operand.vmem [shape: f32[2,128], index: 1, kind: input, shape index: {}]
  %s2 = inlined_call_operand.hbm [shape: f32[2,128], index: 2, kind: output, shape index: {}]
  $region1: #{mul.1} parent=0
    #allocation0 [shape = 'u8[1024]{0}', space=vmem, size = 0x400, scoped, tag = 'operand span for operand 2']
    #allocation1 [shape = 's32[1]{0}', space=sflag, size = 0x4, scoped, tag = 'scoped memory for mul.1']
    %3 = vsyncpa [#allocation1], 0
    %v4 = vld [vmem:[%s0] sm:$0x3]
    %v5 = vld [vmem:[%s1] sm:$0x3]
    %6 = xla_tuple %v4, %v5
    %7 = xla_tuple %6
    %v8 = vmul.f32 %v4, %v5
    %9 = xla_tuple %v8
    %10 = vst [vmem:[#allocation0] sm:$0x3] %v8
    %12 = vsyncadd [#allocation1], 0
    %s14 = sshll.u32 [#allocation0], 4
    %s15 = int_to_ptr.vmem [resolvable:$true] %s14
    %s16 = sshll.u32 %s2, 4
    %s17 = int_to_ptr.hbm [resolvable:$true] %s16
    %19 = dma.vmem_to_hbm [thread:$0]  %s15, 32, %s17, [#allocation1]
    %21 = dma.done [#allocation1], 32
    %22 = vsyncpa [#allocation1], 1

// kernel: hf_bert_encoder_for_mlm.1
$region0: #{hf_bert_encoder_for_mlm.1}
  #allocation0 [shape = 'u32[]', space=smem, size = 0x4, offset = 0x4, fixed_abs, tag = 'smem constant byte address 0x4 - core index']
  #allocation1 [shape = 'u32[72,128]{1,0:T(1,128)}', space=vmem, size = 0x9000, scoped, tag = 'internal scratch']
  %s0 = inlined_call_operand.vmem [shape: f32[16,32], index: 0, kind: input, shape index: {}]
  %s1 = inlined_call_operand.vmem [shape: f32[32,32], index: 1, kind: input, shape index: {}]
  %s2 = inlined_call_operand.vmem [shape: f32[16,1], index: 2, kind: input, shape index: {}]
  %s3 = inlined_call_operand.vmem [shape: f32[1,32], index: 3, kind: input, shape index: {}]
  %s4 = inlined_call_operand.vmem [shape: f32[1,32], index: 4, kind: input, shape index: {}]
  %s5 = inlined_call_operand.vmem [shape: bf16[2,32,96], index: 5, kind: input, shape index: {}]
  %s6 = inlined_call_operand.vmem [shape: f32[2,1,96], index: 6, kind: input, shape index: {}]
  %s7 = inlined_call_operand.vmem [shape: bf16[2,32,32], index: 7, kind: input, shape index: {}]
  %s8 = inlined_call_operand.vmem [shape: f32[2,1,32], index: 8, kind: input, shape index: {}]
  %s9 = inlined_call_operand.vmem [shape: f32[2,1,32], index: 9, kind: input, shape index: {}]
  %s10 = inlined_call_operand.vmem [shape: f32[2,1,32], index: 10, kind: input, shape index: {}]
  %s11 = inlined_call_operand.vmem [shape: bf16[2,32,64], index: 11, kind: input, shape index: {}]
  %s12 = inlined_call_operand.vmem [shape: f32[2,1,64], index: 12, kind: input, shape index: {}]
  %s13 = inlined_call_operand.vmem [shape: bf16[2,64,32], index: 13, kind: input, shape index: {}]
  %s14 = inlined_call_operand.vmem [shape: f32[2,1,32], index: 14, kind: input, shape index: {}]
  %s15 = inlined_call_operand.vmem [shape: f32[2,1,32], index: 15, kind: input, shape index: {}]
  %s16 = inlined_call_operand.vmem [shape: f32[2,1,32], index: 16, kind: input, shape index: {}]
  %s17 = inlined_call_operand.vmem [shape: bf16[32,32], index: 17, kind: input, shape index: {}]
  %s18 = inlined_call_operand.vmem [shape: f32[1,32], index: 18, kind: input, shape index: {}]
  %s19 = inlined_call_operand.vmem [shape: f32[1,32], index: 19, kind: input, shape index: {}]
  %s20 = inlined_call_operand.vmem [shape: f32[1,32], index: 20, kind: input, shape index: {}]
  %s21 = inlined_call_operand.vmem [shape: bf16[32,128], index: 21, kind: input, shape index: {}]
  %s22 = inlined_call_operand.vmem [shape: f32[1,128], index: 22, kind: input, shape index: {}]
  %s23 = inlined_call_operand.vmem [shape: f32[1,128], index: 23, kind: input, shape index: {}]
  %s24 = inlined_call_operand.vmem [shape: f32[2,128], index: 24, kind: output, shape index: {0}]
  %s25 = inlined_call_operand.hbm [shape: f32[2,128], index: 25, kind: output, shape index: {1}]
  %26 = xla_tuple %s24, %s25
  %s27 = sld [smem:[#allocation0]]
  $region114: #{hf_bert_encoder_for_mlm.1} parent=0
    _
  %s29 = ssub.s32 1, %s27
  %s30 = scalar_select 0, %s29, %s27
  $region1: #{hf_bert_encoder_for_mlm.1} parent=0
    #allocation2 [shape = 'u8[1024]{0}', space=vmem, size = 0x400, scoped, tag = 'output window, operand 1, single buffered']
    #allocation3 [shape = 's32[1]{0}', space=sflag, size = 0x4, scoped, tag = 'scoped memory for hf_bert_encoder_for_mlm.1']
    %31 = vsyncpa [#allocation3], 0
    // Predicated region
    $region2: #{hf_bert_encoder_for_mlm.1} parent=1 // pred_check
      _
    $region3: #{hf_bert_encoder_for_mlm.1} parent=1 // pred_check_branch
      %33 = sbr.rel (0) target = $region5
    $region4: #{hf_bert_encoder_for_mlm.1} parent=1 // pred_region
      _
    $region5: #{hf_bert_encoder_for_mlm.1} parent=1 // pred_fallthru
      _
    // Predicated region
    $region6: #{hf_bert_encoder_for_mlm.1} parent=1 // pred_check
      _
    $region7: #{hf_bert_encoder_for_mlm.1} parent=1 // pred_check_branch
      %35 = sbr.rel (0) target = $region9
    $region8: #{hf_bert_encoder_for_mlm.1} parent=1 // pred_region
      _
    $region9: #{hf_bert_encoder_for_mlm.1} parent=1 // pred_fallthru
      _
    // Predicated region
    $region10: #{hf_bert_encoder_for_mlm.1} parent=1 // pred_check
      _
    $region11: #{hf_bert_encoder_for_mlm.1} parent=1 // pred_check_branch
      %37 = sbr.rel (0) target = $region13
    $region12: #{hf_bert_encoder_for_mlm.1} parent=1 // pred_region
      _
    $region13: #{hf_bert_encoder_for_mlm.1} parent=1 // pred_fallthru
      _
    // Predicated region
    $region14: #{hf_bert_encoder_for_mlm.1} parent=1 // pred_check
      _
    $region15: #{hf_bert_encoder_for_mlm.1} parent=1 // pred_check_branch
      %39 = sbr.rel (0) target = $region17
    $region16: #{hf_bert_encoder_for_mlm.1} parent=1 // pred_region
      _
    $region17: #{hf_bert_encoder_for_mlm.1} parent=1 // pred_fallthru
      _
    // Predicated region
    $region18: #{hf_bert_encoder_for_mlm.1} parent=1 // pred_check
      _
    $region19: #{hf_bert_encoder_for_mlm.1} parent=1 // pred_check_branch
      %41 = sbr.rel (0) target = $region21
    $region20: #{hf_bert_encoder_for_mlm.1} parent=1 // pred_region
      _
    $region21: #{hf_bert_encoder_for_mlm.1} parent=1 // pred_fallthru
      _
    // Predicated region
    $region22: #{hf_bert_encoder_for_mlm.1} parent=1 // pred_check
      _
    $region23: #{hf_bert_encoder_for_mlm.1} parent=1 // pred_check_branch
      %43 = sbr.rel (0) target = $region25
    $region24: #{hf_bert_encoder_for_mlm.1} parent=1 // pred_region
      _
    $region25: #{hf_bert_encoder_for_mlm.1} parent=1 // pred_fallthru
      _
    // Predicated region
    $region26: #{hf_bert_encoder_for_mlm.1} parent=1 // pred_check
      _
    $region27: #{hf_bert_encoder_for_mlm.1} parent=1 // pred_check_branch
      %45 = sbr.rel (0) target = $region29
    $region28: #{hf_bert_encoder_for_mlm.1} parent=1 // pred_region
      _
    $region29: #{hf_bert_encoder_for_mlm.1} parent=1 // pred_fallthru
      _
    // Predicated region
    $region30: #{hf_bert_encoder_for_mlm.1} parent=1 // pred_check
      _
    $region31: #{hf_bert_encoder_for_mlm.1} parent=1 // pred_check_branch
      %47 = sbr.rel (0) target = $region33
    $region32: #{hf_bert_encoder_for_mlm.1} parent=1 // pred_region
      _
    $region33: #{hf_bert_encoder_for_mlm.1} parent=1 // pred_fallthru
      _
    // Predicated region
    $region34: #{hf_bert_encoder_for_mlm.1} parent=1 // pred_check
      _
    $region35: #{hf_bert_encoder_for_mlm.1} parent=1 // pred_check_branch
      %49 = sbr.rel (0) target = $region37
    $region36: #{hf_bert_encoder_for_mlm.1} parent=1 // pred_region
      _
    $region37: #{hf_bert_encoder_for_mlm.1} parent=1 // pred_fallthru
      _
    // Predicated region
    $region38: #{hf_bert_encoder_for_mlm.1} parent=1 // pred_check
      _
    $region39: #{hf_bert_encoder_for_mlm.1} parent=1 // pred_check_branch
      %51 = sbr.rel (0) target = $region41
    $region40: #{hf_bert_encoder_for_mlm.1} parent=1 // pred_region
      _
    $region41: #{hf_bert_encoder_for_mlm.1} parent=1 // pred_fallthru
      _
    // Predicated region
    $region42: #{hf_bert_encoder_for_mlm.1} parent=1 // pred_check
      _
    $region43: #{hf_bert_encoder_for_mlm.1} parent=1 // pred_check_branch
      %53 = sbr.rel (0) target = $region45
    $region44: #{hf_bert_encoder_for_mlm.1} parent=1 // pred_region
      _
    $region45: #{hf_bert_encoder_for_mlm.1} parent=1 // pred_fallthru
      _
    // Predicated region
    $region46: #{hf_bert_encoder_for_mlm.1} parent=1 // pred_check
      _
    $region47: #{hf_bert_encoder_for_mlm.1} parent=1 // pred_check_branch
      %55 = sbr.rel (0) target = $region49
    $region48: #{hf_bert_encoder_for_mlm.1} parent=1 // pred_region
      _
    $region49: #{hf_bert_encoder_for_mlm.1} parent=1 // pred_fallthru
      _
    // Predicated region
    $region50: #{hf_bert_encoder_for_mlm.1} parent=1 // pred_check
      _
    $region51: #{hf_bert_encoder_for_mlm.1} parent=1 // pred_check_branch
      %57 = sbr.rel (0) target = $region53
    $region52: #{hf_bert_encoder_for_mlm.1} parent=1 // pred_region
      _
    $region53: #{hf_bert_encoder_for_mlm.1} parent=1 // pred_fallthru
      _
    // Predicated region
    $region54: #{hf_bert_encoder_for_mlm.1} parent=1 // pred_check
      _
    $region55: #{hf_bert_encoder_for_mlm.1} parent=1 // pred_check_branch
      %59 = sbr.rel (0) target = $region57
    $region56: #{hf_bert_encoder_for_mlm.1} parent=1 // pred_region
      _
    $region57: #{hf_bert_encoder_for_mlm.1} parent=1 // pred_fallthru
      _
    // Predicated region
    $region58: #{hf_bert_encoder_for_mlm.1} parent=1 // pred_check
      _
    $region59: #{hf_bert_encoder_for_mlm.1} parent=1 // pred_check_branch
      %61 = sbr.rel (0) target = $region61
    $region60: #{hf_bert_encoder_for_mlm.1} parent=1 // pred_region
      _
    $region61: #{hf_bert_encoder_for_mlm.1} parent=1 // pred_fallthru
      _
    // Predicated region
    $region62: #{hf_bert_encoder_for_mlm.1} parent=1 // pred_check
      _
    $region63: #{hf_bert_encoder_for_mlm.1} parent=1 // pred_check_branch
      %63 = sbr.rel (0) target = $region65
    $region64: #{hf_bert_encoder_for_mlm.1} parent=1 // pred_region
      _
    $region65: #{hf_bert_encoder_for_mlm.1} parent=1 // pred_fallthru
      _
    // Predicated region
    $region66: #{hf_bert_encoder_for_mlm.1} parent=1 // pred_check
      _
    $region67: #{hf_bert_encoder_for_mlm.1} parent=1 // pred_check_branch
      %65 = sbr.rel (0) target = $region69
    $region68: #{hf_bert_encoder_for_mlm.1} parent=1 // pred_region
      _
    $region69: #{hf_bert_encoder_for_mlm.1} parent=1 // pred_fallthru
      _
    // Predicated region
    $region70: #{hf_bert_encoder_for_mlm.1} parent=1 // pred_check
      _
    $region71: #{hf_bert_encoder_for_mlm.1} parent=1 // pred_check_branch
      %67 = sbr.rel (0) target = $region73
    $region72: #{hf_bert_encoder_for_mlm.1} parent=1 // pred_region
      _
    $region73: #{hf_bert_encoder_for_mlm.1} parent=1 // pred_fallthru
      _
    // Predicated region
    $region74: #{hf_bert_encoder_for_mlm.1} parent=1 // pred_check
      _
    $region75: #{hf_bert_encoder_for_mlm.1} parent=1 // pred_check_branch
      %69 = sbr.rel (0) target = $region77
    $region76: #{hf_bert_encoder_for_mlm.1} parent=1 // pred_region
      _
    $region77: #{hf_bert_encoder_for_mlm.1} parent=1 // pred_fallthru
      _
    // Predicated region
    $region78: #{hf_bert_encoder_for_mlm.1} parent=1 // pred_check
      _
    $region79: #{hf_bert_encoder_for_mlm.1} parent=1 // pred_check_branch
      %71 = sbr.rel (0) target = $region81
    $region80: #{hf_bert_encoder_for_mlm.1} parent=1 // pred_region
      _
    $region81: #{hf_bert_encoder_for_mlm.1} parent=1 // pred_fallthru
      _
    // Predicated region
    $region82: #{hf_bert_encoder_for_mlm.1} parent=1 // pred_check
      _
    $region83: #{hf_bert_encoder_for_mlm.1} parent=1 // pred_check_branch
      %73 = sbr.rel (0) target = $region85
    $region84: #{hf_bert_encoder_for_mlm.1} parent=1 // pred_region
      _
    $region85: #{hf_bert_encoder_for_mlm.1} parent=1 // pred_fallthru
      _
    // Predicated region
    $region86: #{hf_bert_encoder_for_mlm.1} parent=1 // pred_check
      _
    $region87: #{hf_bert_encoder_for_mlm.1} parent=1 // pred_check_branch
      %75 = sbr.rel (0) target = $region89
    $region88: #{hf_bert_encoder_for_mlm.1} parent=1 // pred_region
      _
    $region89: #{hf_bert_encoder_for_mlm.1} parent=1 // pred_fallthru
      _
    // Predicated region
    $region90: #{hf_bert_encoder_for_mlm.1} parent=1 // pred_check
      _
    $region91: #{hf_bert_encoder_for_mlm.1} parent=1 // pred_check_branch
      %77 = sbr.rel (0) target = $region93
    $region92: #{hf_bert_encoder_for_mlm.1} parent=1 // pred_region
      _
    $region93: #{hf_bert_encoder_for_mlm.1} parent=1 // pred_fallthru
      _
    // Predicated region
    $region94: #{hf_bert_encoder_for_mlm.1} parent=1 // pred_check
      _
    $region95: #{hf_bert_encoder_for_mlm.1} parent=1 // pred_check_branch
      %79 = sbr.rel (0) target = $region97
    $region96: #{hf_bert_encoder_for_mlm.1} parent=1 // pred_region
      _
    $region97: #{hf_bert_encoder_for_mlm.1} parent=1 // pred_fallthru
      _
    %v81 = vld [vmem:[%s0] sm:$0xff]
    %v82 = vld [vmem:[%s0 + $0x8] sm:$0xff]
    %v83 = vld [vmem:[%s3] sm:$0x1]
    %v84 = vld [vmem:[%s4] sm:$0x1]
    %vm85 = vcmask 261120
    %v86 = vsel %vm85, %v81, 0.0
    %87 = vadd.xlane.f32.xlu0 %v86
    %v88 = vpop.xlane.xlu0 %87
    %v89 = vsel %vm85, %v82, 0.0
    %90 = vadd.xlane.f32.xlu0 %v89
    %v91 = vpop.xlane.xlu0 %90
    %v92 = vrcp.pop 32.0
    %v93 = vmul.f32 32.0, %v92
    %v94 = vsub.f32 1.0, %v93
    %v95 = vmul.f32 %v92, %v94
    %v96 = vadd.f32 %v92, %v95
    %vm97 = vweird.f32 %v92
    %v98 = vsel %vm97, %v92, %v96
    %v99 = vmul.f32 %v88, %v98
    %v100 = vmul.f32 %v91, %v98
    %v101 = vmul.f32 %v81, %v81
    %v102 = vmul.f32 %v82, %v82
    %v103 = vsel %vm85, %v101, 0.0
    %104 = vadd.xlane.f32.xlu0 %v103
    %v105 = vpop.xlane.xlu0 %104
    %v106 = vsel %vm85, %v102, 0.0
    %107 = vadd.xlane.f32.xlu0 %v106
    %v108 = vpop.xlane.xlu0 %107
    %v109 = vmul.f32 %v105, %v98
    %v110 = vmul.f32 %v108, %v98
    %v111 = vmul.f32 %v99, %v99
    %v112 = vmul.f32 %v100, %v100
    %v113 = vsub.f32 %v109, %v111
    %v114 = vsub.f32 %v110, %v112
    %v115 = vsub.f32 %v81, %v99
    %v116 = vsub.f32 %v82, %v100
    %v117 = vadd.f32 %v113, 1e-12
    %v118 = vadd.f32 %v114, 1e-12
    %v119 = vrsqrt.pop %v117
    %v120 = vmul.f32 %v119, %v117
    %v121 = vmul.f32 %v120, %v119
    %v122 = vmul.f32 0.5, %v121
    %v123 = vsub.f32 1.5, %v122
    %v124 = vmul.f32 %v119, %v123
    %vm125 = vweird.f32 %v117
    %vm126 = vweird.f32 %v119
    %vm127 = vmor %vm125, %vm126
    %v128 = vsel %vm127, %v119, %v124
    %v129 = vrsqrt.pop %v118
    %v130 = vmul.f32 %v129, %v118
    %v131 = vmul.f32 %v130, %v129
    %v132 = vmul.f32 0.5, %v131
    %v133 = vsub.f32 1.5, %v132
    %v134 = vmul.f32 %v129, %v133
    %vm135 = vweird.f32 %v118
    %vm136 = vweird.f32 %v129
    %vm137 = vmor %vm135, %vm136
    %v138 = vsel %vm137, %v129, %v134
    %v139 = vmul.f32 %v115, %v128
    %v140 = vmul.f32 %v116, %v138
    %v142 = vperm.slane %v83, 0
    %v144 = vmul.f32 %v139, %v142
    %v145 = vmul.f32 %v140, %v142
    %v147 = vperm.slane %v84, 0
    %v149 = vadd.f32 %v144, %v147
    %v150 = vadd.f32 %v145, %v147
    %v151 = vld [vmem:[%s1] sm:$0xff]
    %v152 = vld [vmem:[%s1 + $0x8] sm:$0xff]
    %v153 = vld [vmem:[%s1 + $0x10] sm:$0xff]
    %v154 = vld [vmem:[%s1 + $0x18] sm:$0xff]
    %v155 = vld [vmem:[%s5] sm:$0xf]
    %v156 = vld [vmem:[%s5 + $0x4] sm:$0xf]
    %v157 = vld [vmem:[%s5 + $0x8] sm:$0xf]
    %v158 = vld [vmem:[%s5 + $0xc] sm:$0xf]
    %v159 = vpack.c.bf16 %v150, %v149
    %v160 = vld [vmem:[%s6] sm:$0x1]
    %v162 = vperm.slane %v160, 0
    %v168 = vunpack.c.l.b16 %v155
    %v169 = vunpack.c.l.b16 %v156
    %v170 = vunpack.c.l.b16 %v157
    %v171 = vunpack.c.l.b16 %v158
    %v172 = vpack.c.b16 %v169, %v168
    %v173 = vpack.c.b16 %v171, %v170
    %v177 = vsel %vm85, %v159, 0
    %179 = vmatpush.bf16.msra.mxu0 0
    %180 = vmatpush.bf16.msra.mxu0 0
    %181 = vmatpush.bf16.msra.mxu0 0
    %182 = vmatpush.bf16.msra.mxu0 0
    %183 = vmatpush.bf16.msra.mxu0 0
    %184 = vmatpush.bf16.msra.mxu0 0
    %185 = vmatpush.bf16.msra.mxu0 %v173
    %186 = vmatpush.bf16.msra.mxu0 %v172
    %187 = vmatmul.bf16.gmra.mxu0 %v177
    %v188 = vpop.f32.mrf.mxu0
    %v189 = vadd.f32 %v162, %v188
    %v190 = vpop.f32.mrf.mxu0
    %v191 = vadd.f32 %v162, %v190
    %192 = vdwg.mxu0
    %v193 = vpack.c.bf16 %v189, %v189
    %v194 = vpack.c.bf16 %v191, %v191
    %v196 = vunpack.c.l.b16 %v193
    %v197 = vpack.c.b16 %v196, %v196
    %198 = vrot.lane.b32.xlu0 %v197, 112
    %v199 = vpop.permute.xlu0 %198
    %v201 = vunpack.c.l.b16 %v194
    %v202 = vpack.c.b16 %v201, %v201
    %203 = vrot.lane.b32.xlu0 %v202, 112
    %v204 = vpop.permute.xlu0 %203
    %vm205 = vcmask 1043456
    %v208 = vsel %vm205, %v193, %v199
    %v211 = vsel %vm205, %v194, %v204
    %214 = vrot.lane.b32.xlu0 %v208, 96
    %v215 = vpop.permute.xlu0 %214
    %216 = vrot.lane.b32.xlu0 %v211, 96
    %v217 = vpop.permute.xlu0 %216
    %vm218 = vcmask 130048
    %v219 = vsel %vm218, %v208, 0
    %v221 = vsel %vm218, %v211, 0
    %v224 = vsel %vm218, %v215, 0
    %v227 = vsel %vm218, %v217, 0
    %229 = vmatpush.bf16.xpose.msra.mxu0 0
    %230 = vmatpush.bf16.xpose.msra.mxu0 0
    %231 = vmatpush.bf16.xpose.msra.mxu0 0
    %232 = vmatpush.bf16.xpose.msra.mxu0 0
    %233 = vmatpush.bf16.xpose.msra.mxu0 0
    %234 = vmatpush.bf16.xpose.msra.mxu0 0
    %235 = vmatpush.bf16.xpose.msra.mxu0 %v227
    %236 = vmatpush.bf16.xpose.msra.mxu0 %v224
    %237 = vmatmul.bf16.gmra.mxu0 %v219
    %v238 = vpop.f32.mrf.mxu0
    %v239 = vadd.f32 0.0, %v238
    %v240 = vpop.f32.mrf.mxu0
    %v241 = vadd.f32 0.0, %v240
    %242 = vmatmul.bf16.gmra.mxu0 %v221
    %v243 = vpop.f32.mrf.mxu0
    %v244 = vadd.f32 0.0, %v243
    %v245 = vpop.f32.mrf.mxu0
    %v246 = vadd.f32 0.0, %v245
    %247 = vdwg.mxu0
    %v248 = vmul.f32 %v239, 0.25
    %v249 = vmul.f32 %v241, 0.25
    %v250 = vmul.f32 %v244, 0.25
    %v251 = vmul.f32 %v246, 0.25
    %v252 = vadd.f32 %v248, %v151
    %v253 = vadd.f32 %v249, %v152
    %v254 = vadd.f32 %v250, %v153
    %v255 = vadd.f32 %v251, %v154
    %v256 = vsel %vm85, %v252, -inf
    %257 = vmax.xlane.f32.xlu0 %v256
    %v258 = vpop.xlane.xlu0 %257
    %v259 = vsel %vm85, %v253, -inf
    %260 = vmax.xlane.f32.xlu0 %v259
    %v261 = vpop.xlane.xlu0 %260
    %v262 = vsel %vm85, %v254, -inf
    %263 = vmax.xlane.f32.xlu0 %v262
    %v264 = vpop.xlane.xlu0 %263
    %v265 = vsel %vm85, %v255, -inf
    %266 = vmax.xlane.f32.xlu0 %v265
    %v267 = vpop.xlane.xlu0 %266
    %v268 = vsub.f32 %v252, %v258
    %v269 = vsub.f32 %v253, %v261
    %v270 = vsub.f32 %v254, %v264
    %v271 = vsub.f32 %v255, %v267
    %v272 = vmul.f32 %v268, 1.442695
    %v273 = vpow.pop %v272
    %v274 = vmul.f32 %v269, 1.442695
    %v275 = vpow.pop %v274
    %v276 = vmul.f32 %v270, 1.442695
    %v277 = vpow.pop %v276
    %v278 = vmul.f32 %v271, 1.442695
    %v279 = vpow.pop %v278
    %v280 = vsel %vm85, %v273, 0.0
    %281 = vadd.xlane.f32.xlu0 %v280
    %v282 = vpop.xlane.xlu0 %281
    %v283 = vsel %vm85, %v275, 0.0
    %284 = vadd.xlane.f32.xlu0 %v283
    %v285 = vpop.xlane.xlu0 %284
    %v286 = vsel %vm85, %v277, 0.0
    %287 = vadd.xlane.f32.xlu0 %v286
    %v288 = vpop.xlane.xlu0 %287
    %v289 = vsel %vm85, %v279, 0.0
    %290 = vadd.xlane.f32.xlu0 %v289
    %v291 = vpop.xlane.xlu0 %290
    %v292 = vrcp.pop %v282
    %v293 = vrcp.pop %v285
    %v294 = vrcp.pop %v288
    %v295 = vrcp.pop %v291
    %v296 = vmul.f32 %v273, %v292
    %v297 = vmul.f32 %v275, %v293
    %v298 = vmul.f32 %v277, %v294
    %v299 = vmul.f32 %v279, %v295
    %v300 = vpack.c.bf16 %v297, %v296
    %v301 = vpack.c.bf16 %v299, %v298
    %302 = vrot.lane.b32.xlu0 %v208, 64
    %v303 = vpop.permute.xlu0 %302
    %304 = vrot.lane.b32.xlu0 %v211, 64
    %v305 = vpop.permute.xlu0 %304
    %v309 = vsel %vm85, %v300, 0
    %v312 = vsel %vm85, %v301, 0
    %314 = vmatpush.bf16.msra.mxu0 0
    %315 = vmatpush.bf16.msra.mxu0 0
    %316 = vmatpush.bf16.msra.mxu0 0
    %317 = vmatpush.bf16.msra.mxu0 0
    %318 = vmatpush.bf16.msra.mxu0 0
    %319 = vmatpush.bf16.msra.mxu0 0
    %320 = vmatpush.bf16.msra.mxu0 %v305
    %321 = vmatpush.bf16.msra.mxu0 %v303
    %322 = vmatmul.bf16.gmra.mxu0 %v309
    %v323 = vpop.f32.mrf.mxu0
    %v324 = vadd.f32 0.0, %v323
    %v325 = vpop.f32.mrf.mxu0
    %v326 = vadd.f32 0.0, %v325
    %327 = vmatmul.bf16.gmra.mxu0 %v312
    %v328 = vpop.f32.mrf.mxu0
    %v329 = vadd.f32 0.0, %v328
    %v330 = vpop.f32.mrf.mxu0
    %v331 = vadd.f32 0.0, %v330
    %332 = vdwg.mxu0
    %334 = vrot.lane.b32.xlu0 %v326, 16
    %v335 = vpop.permute.xlu0 %334
    %v337 = vsel %vm218, %v324, %v335
    %339 = vrot.lane.b32.xlu0 %v331, 16
    %v340 = vpop.permute.xlu0 %339
    %v342 = vsel %vm218, %v329, %v340
    %v343 = vld [vmem:[%s7] sm:$0xf]
    %v344 = vld [vmem:[%s7 + $0x4] sm:$0xf]
    %v345 = vld [vmem:[%s7 + $0x8] sm:$0xf]
    %v346 = vld [vmem:[%s7 + $0xc] sm:$0xf]
    %v347 = vpack.c.bf16 %v342, %v337
    %v348 = vld [vmem:[%s8] sm:$0x1]
    %v350 = vperm.slane %v348, 0
    %v356 = vunpack.c.l.b16 %v343
    %v357 = vunpack.c.l.b16 %v344
    %v358 = vunpack.c.l.b16 %v345
    %v359 = vunpack.c.l.b16 %v346
    %v360 = vpack.c.b16 %v357, %v356
    %v361 = vpack.c.b16 %v359, %v358
    %v365 = vsel %vm85, %v347, 0
    %367 = vmatpush.bf16.msra.mxu0 0
    %368 = vmatpush.bf16.msra.mxu0 0
    %369 = vmatpush.bf16.msra.mxu0 0
    %370 = vmatpush.bf16.msra.mxu0 0
    %371 = vmatpush.bf16.msra.mxu0 0
    %372 = vmatpush.bf16.msra.mxu0 0
    %373 = vmatpush.bf16.msra.mxu0 %v361
    %374 = vmatpush.bf16.msra.mxu0 %v360
    %375 = vmatmul.bf16.gmra.mxu0 %v365
    %v376 = vpop.f32.mrf.mxu0
    %v377 = vadd.f32 %v350, %v376
    %v378 = vpop.f32.mrf.mxu0
    %v379 = vadd.f32 %v350, %v378
    %380 = vdwg.mxu0
    %v381 = vadd.f32 %v377, %v149
    %v382 = vadd.f32 %v379, %v150
    %v383 = vld [vmem:[%s9] sm:$0x1]
    %v384 = vld [vmem:[%s10] sm:$0x1]
    %v385 = vsel %vm85, %v381, 0.0
    %386 = vadd.xlane.f32.xlu0 %v385
    %v387 = vpop.xlane.xlu0 %386
    %v388 = vsel %vm85, %v382, 0.0
    %389 = vadd.xlane.f32.xlu0 %v388
    %v390 = vpop.xlane.xlu0 %389
    %v391 = vmul.f32 %v387, %v98
    %v392 = vmul.f32 %v390, %v98
    %v393 = vmul.f32 %v381, %v381
    %v394 = vmul.f32 %v382, %v382
    %v395 = vsel %vm85, %v393, 0.0
    %396 = vadd.xlane.f32.xlu0 %v395
    %v397 = vpop.xlane.xlu0 %396
    %v398 = vsel %vm85, %v394, 0.0
    %399 = vadd.xlane.f32.xlu0 %v398
    %v400 = vpop.xlane.xlu0 %399
    %v401 = vmul.f32 %v397, %v98
    %v402 = vmul.f32 %v400, %v98
    %v403 = vmul.f32 %v391, %v391
    %v404 = vmul.f32 %v392, %v392
    %v405 = vsub.f32 %v401, %v403
    %v406 = vsub.f32 %v402, %v404
    %v407 = vsub.f32 %v381, %v391
    %v408 = vsub.f32 %v382, %v392
    %v409 = vadd.f32 %v405, 1e-12
    %v410 = vadd.f32 %v406, 1e-12
    %v411 = vrsqrt.pop %v409
    %v412 = vmul.f32 %v411, %v409
    %v413 = vmul.f32 %v412, %v411
    %v414 = vmul.f32 0.5, %v413
    %v415 = vsub.f32 1.5, %v414
    %v416 = vmul.f32 %v411, %v415
    %vm417 = vweird.f32 %v409
    %vm418 = vweird.f32 %v411
    %vm419 = vmor %vm417, %vm418
    %v420 = vsel %vm419, %v411, %v416
    %v421 = vrsqrt.pop %v410
    %v422 = vmul.f32 %v421, %v410
    %v423 = vmul.f32 %v422, %v421
    %v424 = vmul.f32 0.5, %v423
    %v425 = vsub.f32 1.5, %v424
    %v426 = vmul.f32 %v421, %v425
    %vm427 = vweird.f32 %v410
    %vm428 = vweird.f32 %v421
    %vm429 = vmor %vm427, %vm428
    %v430 = vsel %vm429, %v421, %v426
    %v431 = vmul.f32 %v407, %v420
    %v432 = vmul.f32 %v408, %v430
    %v434 = vperm.slane %v383, 0
    %v436 = vmul.f32 %v431, %v434
    %v437 = vmul.f32 %v432, %v434
    %v439 = vperm.slane %v384, 0
    %v441 = vadd.f32 %v436, %v439
    %v442 = vadd.f32 %v437, %v439
    %v443 = vld [vmem:[%s11] sm:$0xf]
    %v444 = vld [vmem:[%s11 + $0x4] sm:$0xf]
    %v445 = vld [vmem:[%s11 + $0x8] sm:$0xf]
    %v446 = vld [vmem:[%s11 + $0xc] sm:$0xf]
    %v447 = vpack.c.bf16 %v442, %v441
    %v448 = vld [vmem:[%s12] sm:$0x1]
    %v450 = vperm.slane %v448, 0
    %v456 = vunpack.c.l.b16 %v443
    %v457 = vunpack.c.l.b16 %v444
    %v458 = vunpack.c.l.b16 %v445
    %v459 = vunpack.c.l.b16 %v446
    %v460 = vpack.c.b16 %v457, %v456
    %v461 = vpack.c.b16 %v459, %v458
    %v465 = vsel %vm85, %v447, 0
    %467 = vmatpush.bf16.msra.mxu0 0
    %468 = vmatpush.bf16.msra.mxu0 0
    %469 = vmatpush.bf16.msra.mxu0 0
    %470 = vmatpush.bf16.msra.mxu0 0
    %471 = vmatpush.bf16.msra.mxu0 0
    %472 = vmatpush.bf16.msra.mxu0 0
    %473 = vmatpush.bf16.msra.mxu0 %v461
    %474 = vmatpush.bf16.msra.mxu0 %v460
    %475 = vmatmul.bf16.gmra.mxu0 %v465
    %v476 = vpop.f32.mrf.mxu0
    %v477 = vadd.f32 %v450, %v476
    %v478 = vpop.f32.mrf.mxu0
    %v479 = vadd.f32 %v450, %v478
    %480 = vdwg.mxu0
    %v481 = vmul.f32 %v477, 0.5
    %v482 = vmul.f32 %v479, 0.5
    %v483 = vmul.f32 %v477, 0.044715
    %v484 = vmul.f32 %v479, 0.044715
    %v485 = vmul.f32 %v483, %v477
    %v486 = vmul.f32 %v484, %v479
    %v487 = vmul.f32 %v485, %v477
    %v488 = vmul.f32 %v486, %v479
    %v489 = vadd.f32 %v477, %v487
    %v490 = vadd.f32 %v479, %v488
    %v491 = vmul.f32 %v489, 0.7978846
    %v492 = vmul.f32 %v490, 0.7978846
    %v493 = vtanh.pop %v491
    %v494 = vtanh.pop %v492
    %v495 = vadd.f32 %v493, 1.0
    %v496 = vadd.f32 %v494, 1.0
    %v497 = vmul.f32 %v481, %v495
    %v498 = vmul.f32 %v482, %v496
    %v499 = vld [vmem:[%s13] sm:$0xf]
    %v500 = vld [vmem:[%s13 + $0x4] sm:$0xf]
    %v501 = vld [vmem:[%s13 + $0x8] sm:$0xf]
    %v502 = vld [vmem:[%s13 + $0xc] sm:$0xf]
    %v503 = vld [vmem:[%s13 + $0x10] sm:$0xf]
    %v504 = vld [vmem:[%s13 + $0x14] sm:$0xf]
    %v505 = vld [vmem:[%s13 + $0x18] sm:$0xf]
    %v506 = vld [vmem:[%s13 + $0x1c] sm:$0xf]
    %v507 = vpack.c.bf16 %v498, %v497
    %v508 = vld [vmem:[%s14] sm:$0x1]
    %v510 = vperm.slane %v508, 0
    %v520 = vunpack.c.l.b16 %v499
    %v521 = vunpack.c.l.b16 %v500
    %v522 = vunpack.c.l.b16 %v501
    %v523 = vunpack.c.l.b16 %v502
    %v524 = vunpack.c.l.b16 %v503
    %v525 = vunpack.c.l.b16 %v504
    %v526 = vunpack.c.l.b16 %v505
    %v527 = vunpack.c.l.b16 %v506
    %v528 = vpack.c.b16 %v521, %v520
    %v529 = vpack.c.b16 %v523, %v522
    %v530 = vpack.c.b16 %v525, %v524
    %v531 = vpack.c.b16 %v527, %v526
    %vm536 = vcmask 523264
    %v538 = vsel %vm536, %v507, 0
    %540 = vmatpush.bf16.msra.mxu0 0
    %541 = vmatpush.bf16.msra.mxu0 0
    %542 = vmatpush.bf16.msra.mxu0 0
    %543 = vmatpush.bf16.msra.mxu0 0
    %544 = vmatpush.bf16.msra.mxu0 %v531
    %545 = vmatpush.bf16.msra.mxu0 %v530
    %546 = vmatpush.bf16.msra.mxu0 %v529
    %547 = vmatpush.bf16.msra.mxu0 %v528
    %548 = vmatmul.bf16.gmra.mxu0 %v538
    %v549 = vpop.f32.mrf.mxu0
    %v550 = vadd.f32 %v510, %v549
    %v551 = vpop.f32.mrf.mxu0
    %v552 = vadd.f32 %v510, %v551
    %553 = vdwg.mxu0
    %v554 = vadd.f32 %v550, %v441
    %v555 = vadd.f32 %v552, %v442
    %v556 = vld [vmem:[%s15] sm:$0x1]
    %v557 = vld [vmem:[%s16] sm:$0x1]
    %v558 = vsel %vm85, %v554, 0.0
    %559 = vadd.xlane.f32.xlu0 %v558
    %v560 = vpop.xlane.xlu0 %559
    %v561 = vsel %vm85, %v555, 0.0
    %562 = vadd.xlane.f32.xlu0 %v561
    %v563 = vpop.xlane.xlu0 %562
    %v564 = vmul.f32 %v560, %v98
    %v565 = vmul.f32 %v563, %v98
    %v566 = vmul.f32 %v554, %v554
    %v567 = vmul.f32 %v555, %v555
    %v568 = vsel %vm85, %v566, 0.0
    %569 = vadd.xlane.f32.xlu0 %v568
    %v570 = vpop.xlane.xlu0 %569
    %v571 = vsel %vm85, %v567, 0.0
    %572 = vadd.xlane.f32.xlu0 %v571
    %v573 = vpop.xlane.xlu0 %572
    %v574 = vmul.f32 %v570, %v98
    %v575 = vmul.f32 %v573, %v98
    %v576 = vmul.f32 %v564, %v564
    %v577 = vmul.f32 %v565, %v565
    %v578 = vsub.f32 %v574, %v576
    %v579 = vsub.f32 %v575, %v577
    %v580 = vsub.f32 %v554, %v564
    %v581 = vsub.f32 %v555, %v565
    %v582 = vadd.f32 %v578, 1e-12
    %v583 = vadd.f32 %v579, 1e-12
    %v584 = vrsqrt.pop %v582
    %v585 = vmul.f32 %v584, %v582
    %v586 = vmul.f32 %v585, %v584
    %v587 = vmul.f32 0.5, %v586
    %v588 = vsub.f32 1.5, %v587
    %v589 = vmul.f32 %v584, %v588
    %vm590 = vweird.f32 %v582
    %vm591 = vweird.f32 %v584
    %vm592 = vmor %vm590, %vm591
    %v593 = vsel %vm592, %v584, %v589
    %v594 = vrsqrt.pop %v583
    %v595 = vmul.f32 %v594, %v583
    %v596 = vmul.f32 %v595, %v594
    %v597 = vmul.f32 0.5, %v596
    %v598 = vsub.f32 1.5, %v597
    %v599 = vmul.f32 %v594, %v598
    %vm600 = vweird.f32 %v583
    %vm601 = vweird.f32 %v594
    %vm602 = vmor %vm600, %vm601
    %v603 = vsel %vm602, %v594, %v599
    %v604 = vmul.f32 %v580, %v593
    %v605 = vmul.f32 %v581, %v603
    %v607 = vperm.slane %v556, 0
    %v609 = vmul.f32 %v604, %v607
    %v610 = vmul.f32 %v605, %v607
    %v612 = vperm.slane %v557, 0
    %v614 = vadd.f32 %v609, %v612
    %v615 = vadd.f32 %v610, %v612
    %s616 = scalar_lea.vmem %s5, 16
    %v617 = vld [vmem:[%s616] sm:$0xf]
    %v618 = vld [vmem:[%s616 + $0x4] sm:$0xf]
    %v619 = vld [vmem:[%s616 + $0x8] sm:$0xf]
    %v620 = vld [vmem:[%s616 + $0xc] sm:$0xf]
    %v621 = vpack.c.bf16 %v615, %v614
    %s622 = scalar_lea.vmem %s6, 1
    %v623 = vld [vmem:[%s622] sm:$0x1]
    %v625 = vperm.slane %v623, 0
    %v631 = vunpack.c.l.b16 %v617
    %v632 = vunpack.c.l.b16 %v618
    %v633 = vunpack.c.l.b16 %v619
    %v634 = vunpack.c.l.b16 %v620
    %v635 = vpack.c.b16 %v632, %v631
    %v636 = vpack.c.b16 %v634, %v633
    %v640 = vsel %vm85, %v621, 0
    %642 = vmatpush.bf16.msra.mxu0 0
    %643 = vmatpush.bf16.msra.mxu0 0
    %644 = vmatpush.bf16.msra.mxu0 0
    %645 = vmatpush.bf16.msra.mxu0 0
    %646 = vmatpush.bf16.msra.mxu0 0
    %647 = vmatpush.bf16.msra.mxu0 0
    %648 = vmatpush.bf16.msra.mxu0 %v636
    %649 = vmatpush.bf16.msra.mxu0 %v635
    %650 = vmatmul.bf16.gmra.mxu0 %v640
    %v651 = vpop.f32.mrf.mxu0
    %v652 = vadd.f32 %v625, %v651
    %v653 = vpop.f32.mrf.mxu0
    %v654 = vadd.f32 %v625, %v653
    %655 = vdwg.mxu0
    %v656 = vpack.c.bf16 %v652, %v652
    %v657 = vpack.c.bf16 %v654, %v654
    %v659 = vunpack.c.l.b16 %v656
    %v660 = vpack.c.b16 %v659, %v659
    %661 = vrot.lane.b32.xlu0 %v660, 112
    %v662 = vpop.permute.xlu0 %661
    %v664 = vunpack.c.l.b16 %v657
    %v665 = vpack.c.b16 %v664, %v664
    %666 = vrot.lane.b32.xlu0 %v665, 112
    %v667 = vpop.permute.xlu0 %666
    %v670 = vsel %vm205, %v656, %v662
    %v673 = vsel %vm205, %v657, %v667
    %676 = vrot.lane.b32.xlu0 %v670, 96
    %v677 = vpop.permute.xlu0 %676
    %678 = vrot.lane.b32.xlu0 %v673, 96
    %v679 = vpop.permute.xlu0 %678
    %v680 = vsel %vm218, %v670, 0
    %v682 = vsel %vm218, %v673, 0
    %v685 = vsel %vm218, %v677, 0
    %v688 = vsel %vm218, %v679, 0
    %690 = vmatpush.bf16.xpose.msra.mxu0 0
    %691 = vmatpush.bf16.xpose.msra.mxu0 0
    %692 = vmatpush.bf16.xpose.msra.mxu0 0
    %693 = vmatpush.bf16.xpose.msra.mxu0 0
    %694 = vmatpush.bf16.xpose.msra.mxu0 0
    %695 = vmatpush.bf16.xpose.msra.mxu0 0
    %696 = vmatpush.bf16.xpose.msra.mxu0 %v688
    %697 = vmatpush.bf16.xpose.msra.mxu0 %v685
    %698 = vmatmul.bf16.gmra.mxu0 %v680
    %v699 = vpop.f32.mrf.mxu0
    %v700 = vadd.f32 0.0, %v699
    %v701 = vpop.f32.mrf.mxu0
    %v702 = vadd.f32 0.0, %v701
    %703 = vmatmul.bf16.gmra.mxu0 %v682
    %v704 = vpop.f32.mrf.mxu0
    %v705 = vadd.f32 0.0, %v704
    %v706 = vpop.f32.mrf.mxu0
    %v707 = vadd.f32 0.0, %v706
    %708 = vdwg.mxu0
    %v709 = vmul.f32 %v700, 0.25
    %v710 = vmul.f32 %v702, 0.25
    %v711 = vmul.f32 %v705, 0.25
    %v712 = vmul.f32 %v707, 0.25
    %v713 = vadd.f32 %v709, %v151
    %v714 = vadd.f32 %v710, %v152
    %v715 = vadd.f32 %v711, %v153
    %v716 = vadd.f32 %v712, %v154
    %v717 = vsel %vm85, %v713, -inf
    %718 = vmax.xlane.f32.xlu0 %v717
    %v719 = vpop.xlane.xlu0 %718
    %v720 = vsel %vm85, %v714, -inf
    %721 = vmax.xlane.f32.xlu0 %v720
    %v722 = vpop.xlane.xlu0 %721
    %v723 = vsel %vm85, %v715, -inf
    %724 = vmax.xlane.f32.xlu0 %v723
    %v725 = vpop.xlane.xlu0 %724
    %v726 = vsel %vm85, %v716, -inf
    %727 = vmax.xlane.f32.xlu0 %v726
    %v728 = vpop.xlane.xlu0 %727
    %v729 = vsub.f32 %v713, %v719
    %v730 = vsub.f32 %v714, %v722
    %v731 = vsub.f32 %v715, %v725
    %v732 = vsub.f32 %v716, %v728
    %v733 = vmul.f32 %v729, 1.442695
    %v734 = vpow.pop %v733
    %v735 = vmul.f32 %v730, 1.442695
    %v736 = vpow.pop %v735
    %v737 = vmul.f32 %v731, 1.442695
    %v738 = vpow.pop %v737
    %v739 = vmul.f32 %v732, 1.442695
    %v740 = vpow.pop %v739
    %v741 = vsel %vm85, %v734, 0.0
    %742 = vadd.xlane.f32.xlu0 %v741
    %v743 = vpop.xlane.xlu0 %742
    %v744 = vsel %vm85, %v736, 0.0
    %745 = vadd.xlane.f32.xlu0 %v744
    %v746 = vpop.xlane.xlu0 %745
    %v747 = vsel %vm85, %v738, 0.0
    %748 = vadd.xlane.f32.xlu0 %v747
    %v749 = vpop.xlane.xlu0 %748
    %v750 = vsel %vm85, %v740, 0.0
    %751 = vadd.xlane.f32.xlu0 %v750
    %v752 = vpop.xlane.xlu0 %751
    %v753 = vrcp.pop %v743
    %v754 = vrcp.pop %v746
    %v755 = vrcp.pop %v749
    %v756 = vrcp.pop %v752
    %v757 = vmul.f32 %v734, %v753
    %v758 = vmul.f32 %v736, %v754
    %v759 = vmul.f32 %v738, %v755
    %v760 = vmul.f32 %v740, %v756
    %v761 = vpack.c.bf16 %v758, %v757
    %v762 = vpack.c.bf16 %v760, %v759
    %763 = vrot.lane.b32.xlu0 %v670, 64
    %v764 = vpop.permute.xlu0 %763
    %765 = vrot.lane.b32.xlu0 %v673, 64
    %v766 = vpop.permute.xlu0 %765
    %v770 = vsel %vm85, %v761, 0
    %v773 = vsel %vm85, %v762, 0
    %775 = vmatpush.bf16.msra.mxu0 0
    %776 = vmatpush.bf16.msra.mxu0 0
    %777 = vmatpush.bf16.msra.mxu0 0
    %778 = vmatpush.bf16.msra.mxu0 0
    %779 = vmatpush.bf16.msra.mxu0 0
    %780 = vmatpush.bf16.msra.mxu0 0
    %781 = vmatpush.bf16.msra.mxu0 %v766
    %782 = vmatpush.bf16.msra.mxu0 %v764
    %783 = vmatmul.bf16.gmra.mxu0 %v770
    %v784 = vpop.f32.mrf.mxu0
    %v785 = vadd.f32 0.0, %v784
    %v786 = vpop.f32.mrf.mxu0
    %v787 = vadd.f32 0.0, %v786
    %788 = vmatmul.bf16.gmra.mxu0 %v773
    %v789 = vpop.f32.mrf.mxu0
    %v790 = vadd.f32 0.0, %v789
    %v791 = vpop.f32.mrf.mxu0
    %v792 = vadd.f32 0.0, %v791
    %793 = vdwg.mxu0
    %795 = vrot.lane.b32.xlu0 %v787, 16
    %v796 = vpop.permute.xlu0 %795
    %v798 = vsel %vm218, %v785, %v796
    %800 = vrot.lane.b32.xlu0 %v792, 16
    %v801 = vpop.permute.xlu0 %800
    %v803 = vsel %vm218, %v790, %v801
    %s804 = scalar_lea.vmem %s7, 16
    %v805 = vld [vmem:[%s804] sm:$0xf]
    %v806 = vld [vmem:[%s804 + $0x4] sm:$0xf]
    %v807 = vld [vmem:[%s804 + $0x8] sm:$0xf]
    %v808 = vld [vmem:[%s804 + $0xc] sm:$0xf]
    %v809 = vpack.c.bf16 %v803, %v798
    %s810 = scalar_lea.vmem %s8, 1
    %v811 = vld [vmem:[%s810] sm:$0x1]
    %v813 = vperm.slane %v811, 0
    %v819 = vunpack.c.l.b16 %v805
    %v820 = vunpack.c.l.b16 %v806
    %v821 = vunpack.c.l.b16 %v807
    %v822 = vunpack.c.l.b16 %v808
    %v823 = vpack.c.b16 %v820, %v819
    %v824 = vpack.c.b16 %v822, %v821
    %v828 = vsel %vm85, %v809, 0
    %830 = vmatpush.bf16.msra.mxu0 0
    %831 = vmatpush.bf16.msra.mxu0 0
    %832 = vmatpush.bf16.msra.mxu0 0
    %833 = vmatpush.bf16.msra.mxu0 0
    %834 = vmatpush.bf16.msra.mxu0 0
    %835 = vmatpush.bf16.msra.mxu0 0
    %836 = vmatpush.bf16.msra.mxu0 %v824
    %837 = vmatpush.bf16.msra.mxu0 %v823
    %838 = vmatmul.bf16.gmra.mxu0 %v828
    %v839 = vpop.f32.mrf.mxu0
    %v840 = vadd.f32 %v813, %v839
    %v841 = vpop.f32.mrf.mxu0
    %v842 = vadd.f32 %v813, %v841
    %843 = vdwg.mxu0
    %v844 = vadd.f32 %v840, %v614
    %v845 = vadd.f32 %v842, %v615
    %s846 = scalar_lea.vmem %s9, 1
    %v847 = vld [vmem:[%s846] sm:$0x1]
    %s848 = scalar_lea.vmem %s10, 1
    %v849 = vld [vmem:[%s848] sm:$0x1]
    %v850 = vsel %vm85, %v844, 0.0
    %851 = vadd.xlane.f32.xlu0 %v850
    %v852 = vpop.xlane.xlu0 %851
    %v853 = vsel %vm85, %v845, 0.0
    %854 = vadd.xlane.f32.xlu0 %v853
    %v855 = vpop.xlane.xlu0 %854
    %v856 = vmul.f32 %v852, %v98
    %v857 = vmul.f32 %v855, %v98
    %v858 = vmul.f32 %v844, %v844
    %v859 = vmul.f32 %v845, %v845
    %v860 = vsel %vm85, %v858, 0.0
    %861 = vadd.xlane.f32.xlu0 %v860
    %v862 = vpop.xlane.xlu0 %861
    %v863 = vsel %vm85, %v859, 0.0
    %864 = vadd.xlane.f32.xlu0 %v863
    %v865 = vpop.xlane.xlu0 %864
    %v866 = vmul.f32 %v862, %v98
    %v867 = vmul.f32 %v865, %v98
    %v868 = vmul.f32 %v856, %v856
    %v869 = vmul.f32 %v857, %v857
    %v870 = vsub.f32 %v866, %v868
    %v871 = vsub.f32 %v867, %v869
    %v872 = vsub.f32 %v844, %v856
    %v873 = vsub.f32 %v845, %v857
    %v874 = vadd.f32 %v870, 1e-12
    %v875 = vadd.f32 %v871, 1e-12
    %v876 = vrsqrt.pop %v874
    %v877 = vmul.f32 %v876, %v874
    %v878 = vmul.f32 %v877, %v876
    %v879 = vmul.f32 0.5, %v878
    %v880 = vsub.f32 1.5, %v879
    %v881 = vmul.f32 %v876, %v880
    %vm882 = vweird.f32 %v874
    %vm883 = vweird.f32 %v876
    %vm884 = vmor %vm882, %vm883
    %v885 = vsel %vm884, %v876, %v881
    %v886 = vrsqrt.pop %v875
    %v887 = vmul.f32 %v886, %v875
    %v888 = vmul.f32 %v887, %v886
    %v889 = vmul.f32 0.5, %v888
    %v890 = vsub.f32 1.5, %v889
    %v891 = vmul.f32 %v886, %v890
    %vm892 = vweird.f32 %v875
    %vm893 = vweird.f32 %v886
    %vm894 = vmor %vm892, %vm893
    %v895 = vsel %vm894, %v886, %v891
    %v896 = vmul.f32 %v872, %v885
    %v897 = vmul.f32 %v873, %v895
    %v899 = vperm.slane %v847, 0
    %v901 = vmul.f32 %v896, %v899
    %v902 = vmul.f32 %v897, %v899
    %v904 = vperm.slane %v849, 0
    %v906 = vadd.f32 %v901, %v904
    %v907 = vadd.f32 %v902, %v904
    %s908 = scalar_lea.vmem %s11, 16
    %v909 = vld [vmem:[%s908] sm:$0xf]
    %v910 = vld [vmem:[%s908 + $0x4] sm:$0xf]
    %v911 = vld [vmem:[%s908 + $0x8] sm:$0xf]
    %v912 = vld [vmem:[%s908 + $0xc] sm:$0xf]
    %v913 = vpack.c.bf16 %v907, %v906
    %s914 = scalar_lea.vmem %s12, 1
    %v915 = vld [vmem:[%s914] sm:$0x1]
    %v917 = vperm.slane %v915, 0
    %v923 = vunpack.c.l.b16 %v909
    %v924 = vunpack.c.l.b16 %v910
    %v925 = vunpack.c.l.b16 %v911
    %v926 = vunpack.c.l.b16 %v912
    %v927 = vpack.c.b16 %v924, %v923
    %v928 = vpack.c.b16 %v926, %v925
    %v932 = vsel %vm85, %v913, 0
    %934 = vmatpush.bf16.msra.mxu0 0
    %935 = vmatpush.bf16.msra.mxu0 0
    %936 = vmatpush.bf16.msra.mxu0 0
    %937 = vmatpush.bf16.msra.mxu0 0
    %938 = vmatpush.bf16.msra.mxu0 0
    %939 = vmatpush.bf16.msra.mxu0 0
    %940 = vmatpush.bf16.msra.mxu0 %v928
    %941 = vmatpush.bf16.msra.mxu0 %v927
    %942 = vmatmul.bf16.gmra.mxu0 %v932
    %v943 = vpop.f32.mrf.mxu0
    %v944 = vadd.f32 %v917, %v943
    %v945 = vpop.f32.mrf.mxu0
    %v946 = vadd.f32 %v917, %v945
    %947 = vdwg.mxu0
    %v948 = vmul.f32 %v944, 0.5
    %v949 = vmul.f32 %v946, 0.5
    %v950 = vmul.f32 %v944, 0.044715
    %v951 = vmul.f32 %v946, 0.044715
    %v952 = vmul.f32 %v950, %v944
    %v953 = vmul.f32 %v951, %v946
    %v954 = vmul.f32 %v952, %v944
    %v955 = vmul.f32 %v953, %v946
    %v956 = vadd.f32 %v944, %v954
    %v957 = vadd.f32 %v946, %v955
    %v958 = vmul.f32 %v956, 0.7978846
    %v959 = vmul.f32 %v957, 0.7978846
    %v960 = vtanh.pop %v958
    %v961 = vtanh.pop %v959
    %v962 = vadd.f32 %v960, 1.0
    %v963 = vadd.f32 %v961, 1.0
    %v964 = vmul.f32 %v948, %v962
    %v965 = vmul.f32 %v949, %v963
    %s966 = scalar_lea.vmem %s13, 32
    %v967 = vld [vmem:[%s966] sm:$0xf]
    %v968 = vld [vmem:[%s966 + $0x4] sm:$0xf]
    %v969 = vld [vmem:[%s966 + $0x8] sm:$0xf]
    %v970 = vld [vmem:[%s966 + $0xc] sm:$0xf]
    %v971 = vld [vmem:[%s966 + $0x10] sm:$0xf]
    %v972 = vld [vmem:[%s966 + $0x14] sm:$0xf]
    %v973 = vld [vmem:[%s966 + $0x18] sm:$0xf]
    %v974 = vld [vmem:[%s966 + $0x1c] sm:$0xf]
    %v975 = vpack.c.bf16 %v965, %v964
    %s976 = scalar_lea.vmem %s14, 1
    %v977 = vld [vmem:[%s976] sm:$0x1]
    %v979 = vperm.slane %v977, 0
    %v989 = vunpack.c.l.b16 %v967
    %v990 = vunpack.c.l.b16 %v968
    %v991 = vunpack.c.l.b16 %v969
    %v992 = vunpack.c.l.b16 %v970
    %v993 = vunpack.c.l.b16 %v971
    %v994 = vunpack.c.l.b16 %v972
    %v995 = vunpack.c.l.b16 %v973
    %v996 = vunpack.c.l.b16 %v974
    %v997 = vpack.c.b16 %v990, %v989
    %v998 = vpack.c.b16 %v992, %v991
    %v999 = vpack.c.b16 %v994, %v993
    %v1000 = vpack.c.b16 %v996, %v995
    %v1006 = vsel %vm536, %v975, 0
    %1008 = vmatpush.bf16.msra.mxu0 0
    %1009 = vmatpush.bf16.msra.mxu0 0
    %1010 = vmatpush.bf16.msra.mxu0 0
    %1011 = vmatpush.bf16.msra.mxu0 0
    %1012 = vmatpush.bf16.msra.mxu0 %v1000
    %1013 = vmatpush.bf16.msra.mxu0 %v999
    %1014 = vmatpush.bf16.msra.mxu0 %v998
    %1015 = vmatpush.bf16.msra.mxu0 %v997
    %1016 = vmatmul.bf16.gmra.mxu0 %v1006
    %v1017 = vpop.f32.mrf.mxu0
    %v1018 = vadd.f32 %v979, %v1017
    %v1019 = vpop.f32.mrf.mxu0
    %v1020 = vadd.f32 %v979, %v1019
    %1021 = vdwg.mxu0
    %v1022 = vadd.f32 %v1018, %v906
    %v1023 = vadd.f32 %v1020, %v907
    %s1024 = scalar_lea.vmem %s15, 1
    %v1025 = vld [vmem:[%s1024] sm:$0x1]
    %s1026 = scalar_lea.vmem %s16, 1
    %v1027 = vld [vmem:[%s1026] sm:$0x1]
    %v1028 = vsel %vm85, %v1022, 0.0
    %1029 = vadd.xlane.f32.xlu0 %v1028
    %v1030 = vpop.xlane.xlu0 %1029
    %v1031 = vsel %vm85, %v1023, 0.0
    %1032 = vadd.xlane.f32.xlu0 %v1031
    %v1033 = vpop.xlane.xlu0 %1032
    %v1034 = vmul.f32 %v1030, %v98
    %v1035 = vmul.f32 %v1033, %v98
    %v1036 = vmul.f32 %v1022, %v1022
    %v1037 = vmul.f32 %v1023, %v1023
    %v1038 = vsel %vm85, %v1036, 0.0
    %1039 = vadd.xlane.f32.xlu0 %v1038
    %v1040 = vpop.xlane.xlu0 %1039
    %v1041 = vsel %vm85, %v1037, 0.0
    %1042 = vadd.xlane.f32.xlu0 %v1041
    %v1043 = vpop.xlane.xlu0 %1042
    %v1044 = vmul.f32 %v1040, %v98
    %v1045 = vmul.f32 %v1043, %v98
    %v1046 = vmul.f32 %v1034, %v1034
    %v1047 = vmul.f32 %v1035, %v1035
    %v1048 = vsub.f32 %v1044, %v1046
    %v1049 = vsub.f32 %v1045, %v1047
    %v1050 = vsub.f32 %v1022, %v1034
    %v1051 = vsub.f32 %v1023, %v1035
    %v1052 = vadd.f32 %v1048, 1e-12
    %v1053 = vadd.f32 %v1049, 1e-12
    %v1054 = vrsqrt.pop %v1052
    %v1055 = vmul.f32 %v1054, %v1052
    %v1056 = vmul.f32 %v1055, %v1054
    %v1057 = vmul.f32 0.5, %v1056
    %v1058 = vsub.f32 1.5, %v1057
    %v1059 = vmul.f32 %v1054, %v1058
    %vm1060 = vweird.f32 %v1052
    %vm1061 = vweird.f32 %v1054
    %vm1062 = vmor %vm1060, %vm1061
    %v1063 = vsel %vm1062, %v1054, %v1059
    %v1064 = vrsqrt.pop %v1053
    %v1065 = vmul.f32 %v1064, %v1053
    %v1066 = vmul.f32 %v1065, %v1064
    %v1067 = vmul.f32 0.5, %v1066
    %v1068 = vsub.f32 1.5, %v1067
    %v1069 = vmul.f32 %v1064, %v1068
    %vm1070 = vweird.f32 %v1053
    %vm1071 = vweird.f32 %v1064
    %vm1072 = vmor %vm1070, %vm1071
    %v1073 = vsel %vm1072, %v1064, %v1069
    %v1074 = vmul.f32 %v1050, %v1063
    %v1075 = vmul.f32 %v1051, %v1073
    %v1077 = vperm.slane %v1025, 0
    %v1079 = vmul.f32 %v1074, %v1077
    %v1080 = vmul.f32 %v1075, %v1077
    %v1082 = vperm.slane %v1027, 0
    %v1084 = vadd.f32 %v1079, %v1082
    %v1085 = vadd.f32 %v1080, %v1082
    %v1087 = vrot.slane %v1085, 7
    %vm1089 = vcmask 1040384
    %v1090 = vsel %vm1089, %v1084, %v1087
    %v1091 = vsel %vm85, %v1090, 0.0
    %1092 = vst [vmem:[#allocation2] sm:$0x3] %v1091
    %v1093 = vld [vmem:[%s17] sm:$0xf]
    %v1094 = vld [vmem:[%s17 + $0x4] sm:$0xf]
    %v1095 = vld [vmem:[%s17 + $0x8] sm:$0xf]
    %v1096 = vld [vmem:[%s17 + $0xc] sm:$0xf]
    %v1097 = vpack.c.bf16 %v1085, %v1084
    %v1098 = vld [vmem:[%s18] sm:$0x1]
    %v1100 = vperm.slane %v1098, 0
    %v1106 = vunpack.c.l.b16 %v1093
    %v1107 = vunpack.c.l.b16 %v1094
    %v1108 = vunpack.c.l.b16 %v1095
    %v1109 = vunpack.c.l.b16 %v1096
    %v1110 = vpack.c.b16 %v1107, %v1106
    %v1111 = vpack.c.b16 %v1109, %v1108
    %v1115 = vsel %vm85, %v1097, 0
    %1117 = vmatpush.bf16.msra.mxu0 0
    %1118 = vmatpush.bf16.msra.mxu0 0
    %1119 = vmatpush.bf16.msra.mxu0 0
    %1120 = vmatpush.bf16.msra.mxu0 0
    %1121 = vmatpush.bf16.msra.mxu0 0
    %1122 = vmatpush.bf16.msra.mxu0 0
    %1123 = vmatpush.bf16.msra.mxu0 %v1111
    %1124 = vmatpush.bf16.msra.mxu0 %v1110
    %1125 = vmatmul.bf16.gmra.mxu0 %v1115
    %v1126 = vpop.f32.mrf.mxu0
    %v1127 = vadd.f32 %v1100, %v1126
    %v1128 = vpop.f32.mrf.mxu0
    %v1129 = vadd.f32 %v1100, %v1128
    %1130 = vdwg.mxu0
    %v1131 = vmul.f32 %v1127, 0.5
    %v1132 = vmul.f32 %v1129, 0.5
    %v1133 = vmul.f32 %v1127, 0.044715
    %v1134 = vmul.f32 %v1129, 0.044715
    %v1135 = vmul.f32 %v1133, %v1127
    %v1136 = vmul.f32 %v1134, %v1129
    %v1137 = vmul.f32 %v1135, %v1127
    %v1138 = vmul.f32 %v1136, %v1129
    %v1139 = vadd.f32 %v1127, %v1137
    %v1140 = vadd.f32 %v1129, %v1138
    %v1141 = vmul.f32 %v1139, 0.7978846
    %v1142 = vmul.f32 %v1140, 0.7978846
    %v1143 = vtanh.pop %v1141
    %v1144 = vtanh.pop %v1142
    %v1145 = vadd.f32 %v1143, 1.0
    %v1146 = vadd.f32 %v1144, 1.0
    %v1147 = vmul.f32 %v1131, %v1145
    %v1148 = vmul.f32 %v1132, %v1146
    %v1149 = vld [vmem:[%s19] sm:$0x1]
    %v1150 = vld [vmem:[%s20] sm:$0x1]
    %v1151 = vsel %vm85, %v1147, 0.0
    %1152 = vadd.xlane.f32.xlu0 %v1151
    %v1153 = vpop.xlane.xlu0 %1152
    %v1154 = vsel %vm85, %v1148, 0.0
    %1155 = vadd.xlane.f32.xlu0 %v1154
    %v1156 = vpop.xlane.xlu0 %1155
    %v1157 = vmul.f32 %v1153, %v98
    %v1158 = vmul.f32 %v1156, %v98
    %v1159 = vmul.f32 %v1147, %v1147
    %v1160 = vmul.f32 %v1148, %v1148
    %v1161 = vsel %vm85, %v1159, 0.0
    %1162 = vadd.xlane.f32.xlu0 %v1161
    %v1163 = vpop.xlane.xlu0 %1162
    %v1164 = vsel %vm85, %v1160, 0.0
    %1165 = vadd.xlane.f32.xlu0 %v1164
    %v1166 = vpop.xlane.xlu0 %1165
    %v1167 = vmul.f32 %v1163, %v98
    %v1168 = vmul.f32 %v1166, %v98
    %v1169 = vmul.f32 %v1157, %v1157
    %v1170 = vmul.f32 %v1158, %v1158
    %v1171 = vsub.f32 %v1167, %v1169
    %v1172 = vsub.f32 %v1168, %v1170
    %v1173 = vsub.f32 %v1147, %v1157
    %v1174 = vsub.f32 %v1148, %v1158
    %v1175 = vadd.f32 %v1171, 1e-12
    %v1176 = vadd.f32 %v1172, 1e-12
    %v1177 = vrsqrt.pop %v1175
    %v1178 = vmul.f32 %v1177, %v1175
    %v1179 = vmul.f32 %v1178, %v1177
    %v1180 = vmul.f32 0.5, %v1179
    %v1181 = vsub.f32 1.5, %v1180
    %v1182 = vmul.f32 %v1177, %v1181
    %vm1183 = vweird.f32 %v1175
    %vm1184 = vweird.f32 %v1177
    %vm1185 = vmor %vm1183, %vm1184
    %v1186 = vsel %vm1185, %v1177, %v1182
    %v1187 = vrsqrt.pop %v1176
    %v1188 = vmul.f32 %v1187, %v1176
    %v1189 = vmul.f32 %v1188, %v1187
    %v1190 = vmul.f32 0.5, %v1189
    %v1191 = vsub.f32 1.5, %v1190
    %v1192 = vmul.f32 %v1187, %v1191
    %vm1193 = vweird.f32 %v1176
    %vm1194 = vweird.f32 %v1187
    %vm1195 = vmor %vm1193, %vm1194
    %v1196 = vsel %vm1195, %v1187, %v1192
    %v1197 = vmul.f32 %v1173, %v1186
    %v1198 = vmul.f32 %v1174, %v1196
    %v1200 = vperm.slane %v1149, 0
    %v1202 = vmul.f32 %v1197, %v1200
    %v1203 = vmul.f32 %v1198, %v1200
    %v1205 = vperm.slane %v1150, 0
    %v1207 = vadd.f32 %v1202, %v1205
    %v1208 = vadd.f32 %v1203, %v1205
    %v1209 = vld [vmem:[%s21] sm:$0xf]
    %v1210 = vld [vmem:[%s21 + $0x4] sm:$0xf]
    %v1211 = vld [vmem:[%s21 + $0x8] sm:$0xf]
    %v1212 = vld [vmem:[%s21 + $0xc] sm:$0xf]
    %v1213 = vpack.c.bf16 %v1208, %v1207
    %v1214 = vld [vmem:[%s22] sm:$0x1]
    %v1216 = vperm.slane %v1214, 0
    %v1222 = vunpack.c.l.b16 %v1209
    %v1223 = vunpack.c.l.b16 %v1210
    %v1224 = vunpack.c.l.b16 %v1211
    %v1225 = vunpack.c.l.b16 %v1212
    %v1226 = vpack.c.b16 %v1223, %v1222
    %v1227 = vpack.c.b16 %v1225, %v1224
    %v1231 = vsel %vm85, %v1213, 0
    %1233 = vmatpush.bf16.msra.mxu0 0
    %1234 = vmatpush.bf16.msra.mxu0 0
    %1235 = vmatpush.bf16.msra.mxu0 0
    %1236 = vmatpush.bf16.msra.mxu0 0
    %1237 = vmatpush.bf16.msra.mxu0 0
    %1238 = vmatpush.bf16.msra.mxu0 0
    %1239 = vmatpush.bf16.msra.mxu0 %v1227
    %1240 = vmatpush.bf16.msra.mxu0 %v1226
    %1241 = vmatmul.bf16.gmra.mxu0 %v1231
    %v1242 = vpop.f32.mrf.mxu0
    %v1243 = vadd.f32 %v1216, %v1242
    %v1244 = vpop.f32.mrf.mxu0
    %v1245 = vadd.f32 %v1216, %v1244
    %1246 = vdwg.mxu0
    %v1247 = vld [vmem:[%s23] sm:$0x1]
    %v1249 = vperm.slane %v1247, 0
    %v1251 = vmul.f32 %v1243, %v1249
    %v1252 = vmul.f32 %v1245, %v1249
    %v1253 = vmax.f32 %v1251, 0.0
    %v1254 = vmax.f32 %v1252, 0.0
    %v1255 = vadd.f32 %v1253, 1.0
    %v1256 = vadd.f32 %v1254, 1.0
    %v1257 = vlog2.pop %v1255
    %v1258 = vmul.f32 %v1257, 0.6931472
    %v1259 = vlog2.pop %v1256
    %v1260 = vmul.f32 %v1259, 0.6931472
    %v1261 = vld [vmem:[%s2] sm:$0xff]
    %v1262 = vld [vmem:[%s2 + $0x8] sm:$0xff]
    %1264 = vset.pattern.permute.xlu0 0
    %1265 = vperm.xlu0 %1264, %v1261
    %v1266 = vpop.permute.xlu0 %1265
    %1269 = vset.pattern.permute.xlu0 0
    %1270 = vperm.xlu0 %1269, %v1262
    %v1271 = vpop.permute.xlu0 %1270
    %v1273 = vmul.f32 %v1258, %v1266
    %v1274 = vmul.f32 %v1260, %v1271
    %v1275 = vrot.slane %v1273, 4
    %v1276 = vmax.f32 %v1273, %v1275
    %v1277 = vrot.slane %v1276, 2
    %v1278 = vmax.f32 %v1276, %v1277
    %v1279 = vrot.slane %v1278, 1
    %v1280 = vmax.f32 %v1278, %v1279
    %v1281 = vrot.slane %v1274, 4
    %v1282 = vmax.f32 %v1274, %v1281
    %v1283 = vrot.slane %v1282, 2
    %v1284 = vmax.f32 %v1282, %v1283
    %v1285 = vrot.slane %v1284, 1
    %v1286 = vmax.f32 %v1284, %v1285
    %v1287 = vsel %vm1089, %v1280, %v1286
    %1288 = vst [vmem:[%s24] sm:$0x3] %v1287
    // Predicated region
    $region98: #{hf_bert_encoder_for_mlm.1} parent=1 // pred_check
      _
    $region99: #{hf_bert_encoder_for_mlm.1} parent=1 // pred_check_branch
      %1290 = sbr.rel (0) target = $region101
    $region100: #{hf_bert_encoder_for_mlm.1} parent=1 // pred_region
      _
    $region101: #{hf_bert_encoder_for_mlm.1} parent=1 // pred_fallthru
      _
    // Predicated region
    $region102: #{hf_bert_encoder_for_mlm.1} parent=1 // pred_check
      _
    $region103: #{hf_bert_encoder_for_mlm.1} parent=1 // pred_check_branch
      %1292 = sbr.rel (0) target = $region105
    $region104: #{hf_bert_encoder_for_mlm.1} parent=1 // pred_region
      %1294 = vsyncadd [#allocation3], 0
      %s1296 = sshll.u32 [#allocation2], 4
      %s1297 = int_to_ptr.vmem [resolvable:$true] %s1296
      %s1298 = sshll.u32 %s25, 4
      %s1299 = int_to_ptr.hbm [resolvable:$true] %s1298
      %1301 = dma.vmem_to_hbm [thread:$0]  %s1297, 32, %s1299, [#allocation3]
    $region105: #{hf_bert_encoder_for_mlm.1} parent=1 // pred_fallthru
      _
    // Predicated region
    $region106: #{hf_bert_encoder_for_mlm.1} parent=1 // pred_check
      _
    $region107: #{hf_bert_encoder_for_mlm.1} parent=1 // pred_check_branch
      %1303 = sbr.rel (0) target = $region109
    $region108: #{hf_bert_encoder_for_mlm.1} parent=1 // pred_region
      _
    $region109: #{hf_bert_encoder_for_mlm.1} parent=1 // pred_fallthru
      _
    // Predicated region
    $region110: #{hf_bert_encoder_for_mlm.1} parent=1 // pred_check
      _
    $region111: #{hf_bert_encoder_for_mlm.1} parent=1 // pred_check_branch
      %1305 = sbr.rel (0) target = $region113
    $region112: #{hf_bert_encoder_for_mlm.1} parent=1 // pred_region
      %1307 = dma.done [#allocation3], 32
    $region113: #{hf_bert_encoder_for_mlm.1} parent=1 // pred_fallthru
      _
    %1308 = vsyncpa [#allocation3], 1

</llo_original>
